<compile_context>
chip_gen: v6e
topology: v6e:2x2x1
jax: 0.10.0
libtpu: 0.0.40
codegen_flags: <defaults>
</compile_context>

<pallas_src>
import jax
import jax.numpy as jnp
from jax import lax
from jax.experimental import pallas as pl
from jax.experimental.pallas import tpu as pltpu

NUM_FEATURES = 1280   # efficientnet_b0 classifier[1].in_features
HIDDEN = 256
NUM_CLASSES = 6
OUT_PAD = 128         # lane-dense padded output width
BN_EPS = 1e-5
TILE_N_MAX = 64       # batch rows per grid step (bf16 feat tile stays well
                      # under v5e's 16 MiB / v7x's 64 MiB VMEM budgets)


def head_kernel(feat_ref, w1_ref, b1_ref, w2_ref, b2_ref, out_ref):
    # adaptive_avg_pool2d(1) + flatten: mean over spatial (sublane) axis.
    pooled = jnp.mean(feat_ref[...].astype(jnp.float32), axis=1)     # (TN, C)

    # Dropout(p=0.3): identity (eval).  Linear(1280, 256) on the MXU in bf16
    # with f32 accumulation, then ReLU.
    h = jnp.dot(pooled.astype(jnp.bfloat16), w1_ref[...],
                preferred_element_type=jnp.float32) + b1_ref[...]    # (TN, 256)
    h = jnp.maximum(h, 0.0)

    # BatchNorm1d(256) (eval) is folded into w2/b2 offline.
    # Dropout(p=0.2): identity (eval).  Linear(256, 6) padded to 128 lanes.
    out_ref[...] = jnp.dot(h, w2_ref[...],
                           preferred_element_type=jnp.float32) + b2_ref[...]


def waste_classifier_head(feat_nchw, params):
    """feat_nchw: (N, 1280, H, W) f32 backbone feature map -> (N, 6) logits."""
    n, c, h, w = feat_nchw.shape
    assert c == NUM_FEATURES
    hw = h * w

    # Channels-last so C=1280 is the lane dim; stream features in bf16.
    feat = jnp.transpose(feat_nchw, (0, 2, 3, 1)).reshape(n, hw, c)
    feat = feat.astype(jnp.bfloat16)

    # Fold eval-mode BatchNorm1d into the second Linear (numerically exact).
    scale = params["gamma"] * lax.rsqrt(params["var"] + BN_EPS)      # (1, 256)
    shift = params["beta"] - params["mean"] * scale                  # (1, 256)
    w2f = params["w2"] * scale.reshape(HIDDEN, 1)                    # (256, 6)
    b2f = params["b2"] + shift @ params["w2"]                        # (1, 6)
    # Pad classifier to 128 output lanes for unmasked stores.
    w2p = jnp.zeros((HIDDEN, OUT_PAD), jnp.float32).at[:, :NUM_CLASSES].set(w2f)
    b2p = jnp.zeros((1, OUT_PAD), jnp.float32).at[:, :NUM_CLASSES].set(b2f)

    w1 = params["w1"].astype(jnp.bfloat16)
    b1 = params["b1"].astype(jnp.float32)

    # Batch tiling: round N up to a multiple of 8 and tile it.
    tile_n = min(TILE_N_MAX, ((n + 7) // 8) * 8)
    n_pad = ((n + tile_n - 1) // tile_n) * tile_n
    if n_pad != n:
        feat = jnp.pad(feat, ((0, n_pad - n), (0, 0), (0, 0)))

    out = pl.pallas_call(
        head_kernel,
        out_shape=jax.ShapeDtypeStruct((n_pad, OUT_PAD), jnp.float32),
        grid_spec=pltpu.PrefetchScalarGridSpec(
            num_scalar_prefetch=0,
            grid=(n_pad // tile_n,),
            in_specs=[
                # Feature tiles are pipelined (double-buffered) over the grid.
                pl.BlockSpec((tile_n, hw, c), lambda i: (i, 0, 0)),
                # Weights / biases: constant index_map -> DMA'd once, resident.
                pl.BlockSpec((NUM_FEATURES, HIDDEN), lambda i: (0, 0)),
                pl.BlockSpec((1, HIDDEN), lambda i: (0, 0)),
                pl.BlockSpec((HIDDEN, OUT_PAD), lambda i: (0, 0)),
                pl.BlockSpec((1, OUT_PAD), lambda i: (0, 0)),
            ],
            out_specs=pl.BlockSpec((tile_n, OUT_PAD), lambda i: (i, 0)),
        ),
        compiler_params=pltpu.CompilerParams(
            dimension_semantics=("parallel",),       # megacore-split the batch
            vmem_limit_bytes=32 * 1024 * 1024,       # safe on v5e/v6e/v7x
        ),
    )(feat, w1, b1, w2p, b2p)

    return out[:n, :NUM_CLASSES]


def init_params(key):
    ks = jax.random.split(key, 6)
    k1 = 1.0 / jnp.sqrt(jnp.float32(NUM_FEATURES))
    k2 = 1.0 / jnp.sqrt(jnp.float32(HIDDEN))
    return {
        # nn.Linear(1280, 256)
        "w1": jax.random.uniform(ks[0], (NUM_FEATURES, HIDDEN), jnp.float32, -k1, k1),
        "b1": jax.random.uniform(ks[1], (1, HIDDEN), jnp.float32, -k1, k1),
        # nn.BatchNorm1d(256) — affine params + running stats (eval mode).
        "gamma": jnp.ones((1, HIDDEN), jnp.float32),
        "beta": jnp.zeros((1, HIDDEN), jnp.float32),
        "mean": 0.01 * jax.random.normal(ks[2], (1, HIDDEN), jnp.float32),
        "var": jnp.abs(jax.random.normal(ks[3], (1, HIDDEN), jnp.float32)) + 1.0,
        # nn.Linear(256, 6)
        "w2": jax.random.uniform(ks[4], (HIDDEN, NUM_CLASSES), jnp.float32, -k2, k2),
        "b2": jax.random.uniform(ks[5], (1, NUM_CLASSES), jnp.float32, -k2, k2),
    }


def reference_forward(feat_nchw, params):
    """Pure-JAX f32 reference of the classifier head (eval semantics)."""
    pooled = jnp.mean(feat_nchw, axis=(2, 3))                        # (N, C)
    h = jnp.maximum(pooled @ params["w1"] + params["b1"], 0.0)
    inv = lax.rsqrt(params["var"] + BN_EPS)
    h = (h - params["mean"]) * inv * params["gamma"] + params["beta"]
    return h @ params["w2"] + params["b2"]


if __name__ == "__main__":
    key = jax.random.PRNGKey(0)
    k_feat, k_params = jax.random.split(key)

    # Small stand-in for backbone.features output: (batch=2, C=1280, 4, 4).
    feat = jax.random.normal(k_feat, (2, NUM_FEATURES, 4, 4), jnp.float32)
    params = init_params(k_params)

    logits = waste_classifier_head(feat, params)
    jax.block_until_ready(logits)
    assert logits.shape == (2, NUM_CLASSES) and logits.dtype == jnp.float32

    ref = reference_forward(feat, params)
    assert jnp.allclose(logits, ref, rtol=5e-2, atol=5e-2), (
        f"max abs diff {jnp.max(jnp.abs(logits - ref))}")
    print("KERNEL_OK")
</pallas_src>

<mosaic_0001>
module attributes {stable_mosaic.version = 11 : i64} {
  func.func @head_kernel(%arg0: i32, %arg1: memref<8x16x1280xbf16, #tpu.memory_space<vmem>>, %arg2: memref<1280x256xbf16, #tpu.memory_space<vmem>>, %arg3: memref<1x256xf32, #tpu.memory_space<vmem>>, %arg4: memref<256x128xf32, #tpu.memory_space<vmem>>, %arg5: memref<1x128xf32, #tpu.memory_space<vmem>>, %arg6: memref<8x128xf32, #tpu.memory_space<vmem>>) attributes {dimension_semantics = [#tpu.dimension_semantics<parallel>], iteration_bounds = array<i64: 1>, scalar_prefetch = 0 : i64, scratch_operands = 0 : i64, tpu.core_type = #tpu.core_type<tc>, window_params = [{transform_indices = @transform_0, window_bounds = array<i64: 8, 16, 1280>}, {pipeline_mode = #tpu.pipeline_mode<synchronous>, transform_indices = @transform_1, window_bounds = array<i64: 1280, 256>}, {pipeline_mode = #tpu.pipeline_mode<synchronous>, transform_indices = @transform_2, window_bounds = array<i64: 1, 256>}, {pipeline_mode = #tpu.pipeline_mode<synchronous>, transform_indices = @transform_3, window_bounds = array<i64: 256, 128>}, {pipeline_mode = #tpu.pipeline_mode<synchronous>, transform_indices = @transform_4, window_bounds = array<i64: 1, 128>}, {transform_indices = @transform_5, window_bounds = array<i64: 8, 128>}]} {
    %c0 = arith.constant 0 : index
    %c0_0 = arith.constant 0 : index
    %c0_1 = arith.constant 0 : index
    %0 = vector.load %arg1[%c0, %c0_0, %c0_1] : memref<8x16x1280xbf16, #tpu.memory_space<vmem>>, vector<8x16x1280xbf16>
    %1 = arith.extf %0 : vector<8x16x1280xbf16> to vector<8x16x1280xf32>
    %cst = arith.constant dense<0.000000e+00> : vector<8x1280xf32>
    %2 = vector.multi_reduction <add>, %1, %cst [1] : vector<8x16x1280xf32> to vector<8x1280xf32>
    %cst_2 = arith.constant 1.600000e+01 : f32
    %3 = vector.broadcast %cst_2 : f32 to vector<8x1280xf32>
    %4 = arith.divf %2, %3 : vector<8x1280xf32>
    %5 = arith.truncf %4 : vector<8x1280xf32> to vector<8x1280xbf16>
    %c0_3 = arith.constant 0 : index
    %c0_4 = arith.constant 0 : index
    %6 = vector.load %arg2[%c0_3, %c0_4] : memref<1280x256xbf16, #tpu.memory_space<vmem>>, vector<1280x256xbf16>
    %cst_5 = arith.constant dense<0.000000e+00> : vector<8x256xf32>
    %7 = tpu.matmul %5, %6, %cst_5 {dimension_numbers = #tpu.dot_dimension_numbers<[1], [0], [0], [1], [0, 0, 1, 1], [], []>} : vector<8x1280xbf16>, vector<1280x256xbf16>, vector<8x256xf32> -> vector<8x256xf32>
    %c0_6 = arith.constant 0 : index
    %c0_7 = arith.constant 0 : index
    %8 = vector.load %arg3[%c0_6, %c0_7] : memref<1x256xf32, #tpu.memory_space<vmem>>, vector<1x256xf32>
    %9 = vector.broadcast %8 : vector<1x256xf32> to vector<8x256xf32>
    %10 = arith.addf %7, %9 : vector<8x256xf32>
    %cst_8 = arith.constant 0.000000e+00 : f32
    %11 = vector.broadcast %cst_8 : f32 to vector<8x256xf32>
    %12 = arith.maximumf %10, %11 : vector<8x256xf32>
    %c0_9 = arith.constant 0 : index
    %c0_10 = arith.constant 0 : index
    %13 = vector.load %arg4[%c0_9, %c0_10] : memref<256x128xf32, #tpu.memory_space<vmem>>, vector<256x128xf32>
    %cst_11 = arith.constant dense<0.000000e+00> : vector<8x128xf32>
    %14 = tpu.matmul %12, %13, %cst_11 {dimension_numbers = #tpu.dot_dimension_numbers<[1], [0], [0], [1], [0, 0, 1, 1], [], []>} : vector<8x256xf32>, vector<256x128xf32>, vector<8x128xf32> -> vector<8x128xf32>
    %c0_12 = arith.constant 0 : index
    %c0_13 = arith.constant 0 : index
    %15 = vector.load %arg5[%c0_12, %c0_13] : memref<1x128xf32, #tpu.memory_space<vmem>>, vector<1x128xf32>
    %16 = vector.broadcast %15 : vector<1x128xf32> to vector<8x128xf32>
    %17 = arith.addf %14, %16 : vector<8x128xf32>
    %c0_14 = arith.constant 0 : index
    %c0_15 = arith.constant 0 : index
    %18 = vector.load %arg6[%c0_14, %c0_15] : memref<8x128xf32, #tpu.memory_space<vmem>>, vector<8x128xf32>
    tpu.vector_store %arg6[%c0_14, %c0_15], %17 {strides = array<i32>} : memref<8x128xf32, #tpu.memory_space<vmem>>, vector<8x128xf32>,
    return
  }
  func.func @transform_0(%arg0: i32) -> (i32, i32, i32) {
    %c0_i32 = arith.constant 0 : i32
    %c0_i32_0 = arith.constant 0 : i32
    %c0_i32_1 = arith.constant 0 : i32
    return %arg0, %c0_i32, %c0_i32_0 : i32, i32, i32
  }
  func.func @transform_1(%arg0: i32) -> (i32, i32) {
    %c0_i32 = arith.constant 0 : i32
    %c0_i32_0 = arith.constant 0 : i32
    %c0_i32_1 = arith.constant 0 : i32
    return %c0_i32, %c0_i32_0 : i32, i32
  }
  func.func @transform_2(%arg0: i32) -> (i32, i32) {
    %c0_i32 = arith.constant 0 : i32
    %c0_i32_0 = arith.constant 0 : i32
    %c0_i32_1 = arith.constant 0 : i32
    return %c0_i32, %c0_i32_0 : i32, i32
  }
  func.func @transform_3(%arg0: i32) -> (i32, i32) {
    %c0_i32 = arith.constant 0 : i32
    %c0_i32_0 = arith.constant 0 : i32
    %c0_i32_1 = arith.constant 0 : i32
    return %c0_i32, %c0_i32_0 : i32, i32
  }
  func.func @transform_4(%arg0: i32) -> (i32, i32) {
    %c0_i32 = arith.constant 0 : i32
    %c0_i32_0 = arith.constant 0 : i32
    %c0_i32_1 = arith.constant 0 : i32
    return %c0_i32, %c0_i32_0 : i32, i32
  }
  func.func @transform_5(%arg0: i32) -> (i32, i32) {
    %c0_i32 = arith.constant 0 : i32
    %c0_i32_0 = arith.constant 0 : i32
    return %arg0, %c0_i32 : i32, i32
  }
}

</mosaic_0001>

<llo_original>
// kernel: tpu_custom_call.1
$region0: #{tpu_custom_call.1}
  #allocation0 [shape = 'u32[]', space=smem, size = 0x4, offset = 0x4, fixed_abs, tag = 'smem constant byte address 0x4 - core index']
  #allocation1 [shape = 'u32[144,128]{1,0:T(1,128)}', space=vmem, size = 0x12000, scoped, tag = 'internal scratch']
  %s0 = inlined_call_operand.hbm [shape: bf16[8,16,1280], index: 0, kind: input, shape index: {}]
  %s1 = inlined_call_operand.hbm [shape: bf16[1280,256], index: 1, kind: input, shape index: {}]
  %s2 = inlined_call_operand.vmem [shape: f32[1,256], index: 2, kind: input, shape index: {}]
  %s3 = inlined_call_operand.hbm [shape: f32[256,128], index: 3, kind: input, shape index: {}]
  %s4 = inlined_call_operand.vmem [shape: f32[1,128], index: 4, kind: input, shape index: {}]
  %s5 = inlined_call_operand.hbm [shape: f32[8,128], index: 5, kind: output, shape index: {}]
  %s6 = sld [smem:[#allocation0]]
  $region42: #{tpu_custom_call.1} parent=0
    _
  %s8 = ssub.s32 1, %s6
  %s9 = scalar_select 0, %s8, %s6
  $region1: #{tpu_custom_call.1} parent=0
    #allocation2 [shape = 'u8[327680]{0}', space=vmem, size = 0x50000, scoped, tag = 'input window, operand 0, single buffered']
    #allocation3 [shape = 's32[1]{0}', space=sflag, size = 0x4, scoped, tag = 'scoped memory for tpu_custom_call.1']
    #allocation4 [shape = 's32[1]{0}', space=sflag, size = 0x4, scoped, tag = 'scoped memory for tpu_custom_call.1']
    #allocation5 [shape = 'u8[655360]{0}', space=vmem, size = 0xa0000, scoped, tag = 'input window, operand 1, single buffered']
    #allocation6 [shape = 's32[1]{0}', space=sflag, size = 0x4, scoped, tag = 'scoped memory for tpu_custom_call.1']
    #allocation7 [shape = 'u8[131072]{0}', space=vmem, size = 0x20000, scoped, tag = 'input window, operand 3, single buffered']
    #allocation8 [shape = 'u8[4096]{0}', space=vmem, size = 0x1000, scoped, tag = 'output window, operand 0, single buffered']
    %10 = vsyncpa [#allocation3], 0
    %11 = vsyncpa [#allocation6], 0
    %12 = vsyncpa [#allocation4], 0
    // Predicated region
    $region2: #{tpu_custom_call.1} parent=1 // pred_check
      _
    $region3: #{tpu_custom_call.1} parent=1 // pred_check_branch
      %14 = sbr.rel (0) target = $region5
    $region4: #{tpu_custom_call.1} parent=1 // pred_region
      %s16 = ssub.s32 10240, 10240
      %17 = vsyncadd [#allocation3], %s16
      %s18 = sshll.u32 [#allocation2], 4
      %s19 = int_to_ptr.vmem [resolvable:$true] %s18
      %24 = dma.hbm_to_vmem [thread:$0]  %s0, 10240, %s19, [#allocation3], 640, 640, 40
    $region5: #{tpu_custom_call.1} parent=1 // pred_fallthru
      _
    // Predicated region
    $region6: #{tpu_custom_call.1} parent=1 // pred_check
      _
    $region7: #{tpu_custom_call.1} parent=1 // pred_check_branch
      %26 = sbr.rel (0) target = $region9
    $region8: #{tpu_custom_call.1} parent=1 // pred_region
      %s28 = ssub.s32 20480, 20480
      %29 = vsyncadd [#allocation6], %s28
      %s30 = sshll.u32 [#allocation5], 4
      %s31 = int_to_ptr.vmem [resolvable:$true] %s30
      %36 = dma.hbm_to_vmem [thread:$0]  %s1, 20480, %s31, [#allocation6], 128, 128, 8
    $region9: #{tpu_custom_call.1} parent=1 // pred_fallthru
      _
    // Predicated region
    $region10: #{tpu_custom_call.1} parent=1 // pred_check
      _
    $region11: #{tpu_custom_call.1} parent=1 // pred_check_branch
      %38 = sbr.rel (0) target = $region13
    $region12: #{tpu_custom_call.1} parent=1 // pred_region
      _
    $region13: #{tpu_custom_call.1} parent=1 // pred_fallthru
      _
    // Predicated region
    $region14: #{tpu_custom_call.1} parent=1 // pred_check
      _
    $region15: #{tpu_custom_call.1} parent=1 // pred_check_branch
      %40 = sbr.rel (0) target = $region17
    $region16: #{tpu_custom_call.1} parent=1 // pred_region
      %s42 = ssub.s32 4096, 4096
      %43 = vsyncadd [#allocation6], %s42
      %s44 = sshll.u32 [#allocation7], 4
      %s45 = int_to_ptr.vmem [resolvable:$true] %s44
      %50 = dma.hbm_to_vmem [thread:$0]  %s3, 4096, %s45, [#allocation6], 128, 128, 8
    $region17: #{tpu_custom_call.1} parent=1 // pred_fallthru
      _
    // Predicated region
    $region18: #{tpu_custom_call.1} parent=1 // pred_check
      _
    $region19: #{tpu_custom_call.1} parent=1 // pred_check_branch
      %52 = sbr.rel (0) target = $region21
    $region20: #{tpu_custom_call.1} parent=1 // pred_region
      _
    $region21: #{tpu_custom_call.1} parent=1 // pred_fallthru
      _
    // Predicated region
    $region22: #{tpu_custom_call.1} parent=1 // pred_check
      _
    $region23: #{tpu_custom_call.1} parent=1 // pred_check_branch
      %54 = sbr.rel (0) target = $region25
    $region24: #{tpu_custom_call.1} parent=1 // pred_region
      %55 = dma.done [#allocation3], 10240
    $region25: #{tpu_custom_call.1} parent=1 // pred_fallthru
      _
    // Predicated region
    $region26: #{tpu_custom_call.1} parent=1 // pred_check
      _
    $region27: #{tpu_custom_call.1} parent=1 // pred_check_branch
      %57 = sbr.rel (0) target = $region29
    $region28: #{tpu_custom_call.1} parent=1 // pred_region
      %58 = dma.done [#allocation6], 20480
    $region29: #{tpu_custom_call.1} parent=1 // pred_fallthru
      _
    // Predicated region
    $region30: #{tpu_custom_call.1} parent=1 // pred_check
      _
    $region31: #{tpu_custom_call.1} parent=1 // pred_check_branch
      %60 = sbr.rel (0) target = $region33
    $region32: #{tpu_custom_call.1} parent=1 // pred_region
      %61 = dma.done [#allocation6], 4096
    $region33: #{tpu_custom_call.1} parent=1 // pred_fallthru
      _
    %v62 = vld [vmem:[#allocation2] sm:$0xff]
    %v63 = vld [vmem:[#allocation2 + $0x8] sm:$0xff]
    %v64 = vld [vmem:[#allocation2 + $0x10] sm:$0xff]
    %v65 = vld [vmem:[#allocation2 + $0x18] sm:$0xff]
    %v66 = vld [vmem:[#allocation2 + $0x20] sm:$0xff]
    %v67 = vld [vmem:[#allocation2 + $0x28] sm:$0xff]
    %v68 = vld [vmem:[#allocation2 + $0x30] sm:$0xff]
    %v69 = vld [vmem:[#allocation2 + $0x38] sm:$0xff]
    %v70 = vld [vmem:[#allocation2 + $0x40] sm:$0xff]
    %v71 = vld [vmem:[#allocation2 + $0x48] sm:$0xff]
    %v72 = vld [vmem:[#allocation2 + $0x50] sm:$0xff]
    %v73 = vld [vmem:[#allocation2 + $0x58] sm:$0xff]
    %v74 = vld [vmem:[#allocation2 + $0x60] sm:$0xff]
    %v75 = vld [vmem:[#allocation2 + $0x68] sm:$0xff]
    %v76 = vld [vmem:[#allocation2 + $0x70] sm:$0xff]
    %v77 = vld [vmem:[#allocation2 + $0x78] sm:$0xff]
    %v78 = vld [vmem:[#allocation2 + $0x80] sm:$0xff]
    %v79 = vld [vmem:[#allocation2 + $0x88] sm:$0xff]
    %v80 = vld [vmem:[#allocation2 + $0x90] sm:$0xff]
    %v81 = vld [vmem:[#allocation2 + $0x98] sm:$0xff]
    %v82 = vld [vmem:[#allocation2 + $0xa0] sm:$0xff]
    %v83 = vld [vmem:[#allocation2 + $0xa8] sm:$0xff]
    %v84 = vld [vmem:[#allocation2 + $0xb0] sm:$0xff]
    %v85 = vld [vmem:[#allocation2 + $0xb8] sm:$0xff]
    %v86 = vld [vmem:[#allocation2 + $0xc0] sm:$0xff]
    %v87 = vld [vmem:[#allocation2 + $0xc8] sm:$0xff]
    %v88 = vld [vmem:[#allocation2 + $0xd0] sm:$0xff]
    %v89 = vld [vmem:[#allocation2 + $0xd8] sm:$0xff]
    %v90 = vld [vmem:[#allocation2 + $0xe0] sm:$0xff]
    %v91 = vld [vmem:[#allocation2 + $0xe8] sm:$0xff]
    %v92 = vld [vmem:[#allocation2 + $0xf0] sm:$0xff]
    %v93 = vld [vmem:[#allocation2 + $0xf8] sm:$0xff]
    %v94 = vld [vmem:[#allocation2 + $0x100] sm:$0xff]
    %v95 = vld [vmem:[#allocation2 + $0x108] sm:$0xff]
    %v96 = vld [vmem:[#allocation2 + $0x110] sm:$0xff]
    %v97 = vld [vmem:[#allocation2 + $0x118] sm:$0xff]
    %v98 = vld [vmem:[#allocation2 + $0x120] sm:$0xff]
    %v99 = vld [vmem:[#allocation2 + $0x128] sm:$0xff]
    %v100 = vld [vmem:[#allocation2 + $0x130] sm:$0xff]
    %v101 = vld [vmem:[#allocation2 + $0x138] sm:$0xff]
    %v102 = vld [vmem:[#allocation2 + $0x140] sm:$0xff]
    %v103 = vld [vmem:[#allocation2 + $0x148] sm:$0xff]
    %v104 = vld [vmem:[#allocation2 + $0x150] sm:$0xff]
    %v105 = vld [vmem:[#allocation2 + $0x158] sm:$0xff]
    %v106 = vld [vmem:[#allocation2 + $0x160] sm:$0xff]
    %v107 = vld [vmem:[#allocation2 + $0x168] sm:$0xff]
    %v108 = vld [vmem:[#allocation2 + $0x170] sm:$0xff]
    %v109 = vld [vmem:[#allocation2 + $0x178] sm:$0xff]
    %v110 = vld [vmem:[#allocation2 + $0x180] sm:$0xff]
    %v111 = vld [vmem:[#allocation2 + $0x188] sm:$0xff]
    %v112 = vld [vmem:[#allocation2 + $0x190] sm:$0xff]
    %v113 = vld [vmem:[#allocation2 + $0x198] sm:$0xff]
    %v114 = vld [vmem:[#allocation2 + $0x1a0] sm:$0xff]
    %v115 = vld [vmem:[#allocation2 + $0x1a8] sm:$0xff]
    %v116 = vld [vmem:[#allocation2 + $0x1b0] sm:$0xff]
    %v117 = vld [vmem:[#allocation2 + $0x1b8] sm:$0xff]
    %v118 = vld [vmem:[#allocation2 + $0x1c0] sm:$0xff]
    %v119 = vld [vmem:[#allocation2 + $0x1c8] sm:$0xff]
    %v120 = vld [vmem:[#allocation2 + $0x1d0] sm:$0xff]
    %v121 = vld [vmem:[#allocation2 + $0x1d8] sm:$0xff]
    %v122 = vld [vmem:[#allocation2 + $0x1e0] sm:$0xff]
    %v123 = vld [vmem:[#allocation2 + $0x1e8] sm:$0xff]
    %v124 = vld [vmem:[#allocation2 + $0x1f0] sm:$0xff]
    %v125 = vld [vmem:[#allocation2 + $0x1f8] sm:$0xff]
    %v126 = vld [vmem:[#allocation2 + $0x200] sm:$0xff]
    %v127 = vld [vmem:[#allocation2 + $0x208] sm:$0xff]
    %v128 = vld [vmem:[#allocation2 + $0x210] sm:$0xff]
    %v129 = vld [vmem:[#allocation2 + $0x218] sm:$0xff]
    %v130 = vld [vmem:[#allocation2 + $0x220] sm:$0xff]
    %v131 = vld [vmem:[#allocation2 + $0x228] sm:$0xff]
    %v132 = vld [vmem:[#allocation2 + $0x230] sm:$0xff]
    %v133 = vld [vmem:[#allocation2 + $0x238] sm:$0xff]
    %v134 = vld [vmem:[#allocation2 + $0x240] sm:$0xff]
    %v135 = vld [vmem:[#allocation2 + $0x248] sm:$0xff]
    %v136 = vld [vmem:[#allocation2 + $0x250] sm:$0xff]
    %v137 = vld [vmem:[#allocation2 + $0x258] sm:$0xff]
    %v138 = vld [vmem:[#allocation2 + $0x260] sm:$0xff]
    %v139 = vld [vmem:[#allocation2 + $0x268] sm:$0xff]
    %v140 = vld [vmem:[#allocation2 + $0x270] sm:$0xff]
    %v141 = vld [vmem:[#allocation2 + $0x278] sm:$0xff]
    %v142 = vunpack.c.l.bf16 %v62
    %v143 = vunpack.c.h.bf16 %v62
    %v144 = vunpack.c.l.bf16 %v63
    %v145 = vunpack.c.h.bf16 %v63
    %v146 = vunpack.c.l.bf16 %v64
    %v147 = vunpack.c.h.bf16 %v64
    %v148 = vunpack.c.l.bf16 %v65
    %v149 = vunpack.c.h.bf16 %v65
    %v150 = vunpack.c.l.bf16 %v66
    %v151 = vunpack.c.h.bf16 %v66
    %v152 = vunpack.c.l.bf16 %v67
    %v153 = vunpack.c.h.bf16 %v67
    %v154 = vunpack.c.l.bf16 %v68
    %v155 = vunpack.c.h.bf16 %v68
    %v156 = vunpack.c.l.bf16 %v69
    %v157 = vunpack.c.h.bf16 %v69
    %v158 = vunpack.c.l.bf16 %v70
    %v159 = vunpack.c.h.bf16 %v70
    %v160 = vunpack.c.l.bf16 %v71
    %v161 = vunpack.c.h.bf16 %v71
    %v162 = vunpack.c.l.bf16 %v72
    %v163 = vunpack.c.h.bf16 %v72
    %v164 = vunpack.c.l.bf16 %v73
    %v165 = vunpack.c.h.bf16 %v73
    %v166 = vunpack.c.l.bf16 %v74
    %v167 = vunpack.c.h.bf16 %v74
    %v168 = vunpack.c.l.bf16 %v75
    %v169 = vunpack.c.h.bf16 %v75
    %v170 = vunpack.c.l.bf16 %v76
    %v171 = vunpack.c.h.bf16 %v76
    %v172 = vunpack.c.l.bf16 %v77
    %v173 = vunpack.c.h.bf16 %v77
    %v174 = vunpack.c.l.bf16 %v78
    %v175 = vunpack.c.h.bf16 %v78
    %v176 = vunpack.c.l.bf16 %v79
    %v177 = vunpack.c.h.bf16 %v79
    %v178 = vunpack.c.l.bf16 %v80
    %v179 = vunpack.c.h.bf16 %v80
    %v180 = vunpack.c.l.bf16 %v81
    %v181 = vunpack.c.h.bf16 %v81
    %v182 = vunpack.c.l.bf16 %v82
    %v183 = vunpack.c.h.bf16 %v82
    %v184 = vunpack.c.l.bf16 %v83
    %v185 = vunpack.c.h.bf16 %v83
    %v186 = vunpack.c.l.bf16 %v84
    %v187 = vunpack.c.h.bf16 %v84
    %v188 = vunpack.c.l.bf16 %v85
    %v189 = vunpack.c.h.bf16 %v85
    %v190 = vunpack.c.l.bf16 %v86
    %v191 = vunpack.c.h.bf16 %v86
    %v192 = vunpack.c.l.bf16 %v87
    %v193 = vunpack.c.h.bf16 %v87
    %v194 = vunpack.c.l.bf16 %v88
    %v195 = vunpack.c.h.bf16 %v88
    %v196 = vunpack.c.l.bf16 %v89
    %v197 = vunpack.c.h.bf16 %v89
    %v198 = vunpack.c.l.bf16 %v90
    %v199 = vunpack.c.h.bf16 %v90
    %v200 = vunpack.c.l.bf16 %v91
    %v201 = vunpack.c.h.bf16 %v91
    %v202 = vunpack.c.l.bf16 %v92
    %v203 = vunpack.c.h.bf16 %v92
    %v204 = vunpack.c.l.bf16 %v93
    %v205 = vunpack.c.h.bf16 %v93
    %v206 = vunpack.c.l.bf16 %v94
    %v207 = vunpack.c.h.bf16 %v94
    %v208 = vunpack.c.l.bf16 %v95
    %v209 = vunpack.c.h.bf16 %v95
    %v210 = vunpack.c.l.bf16 %v96
    %v211 = vunpack.c.h.bf16 %v96
    %v212 = vunpack.c.l.bf16 %v97
    %v213 = vunpack.c.h.bf16 %v97
    %v214 = vunpack.c.l.bf16 %v98
    %v215 = vunpack.c.h.bf16 %v98
    %v216 = vunpack.c.l.bf16 %v99
    %v217 = vunpack.c.h.bf16 %v99
    %v218 = vunpack.c.l.bf16 %v100
    %v219 = vunpack.c.h.bf16 %v100
    %v220 = vunpack.c.l.bf16 %v101
    %v221 = vunpack.c.h.bf16 %v101
    %v222 = vunpack.c.l.bf16 %v102
    %v223 = vunpack.c.h.bf16 %v102
    %v224 = vunpack.c.l.bf16 %v103
    %v225 = vunpack.c.h.bf16 %v103
    %v226 = vunpack.c.l.bf16 %v104
    %v227 = vunpack.c.h.bf16 %v104
    %v228 = vunpack.c.l.bf16 %v105
    %v229 = vunpack.c.h.bf16 %v105
    %v230 = vunpack.c.l.bf16 %v106
    %v231 = vunpack.c.h.bf16 %v106
    %v232 = vunpack.c.l.bf16 %v107
    %v233 = vunpack.c.h.bf16 %v107
    %v234 = vunpack.c.l.bf16 %v108
    %v235 = vunpack.c.h.bf16 %v108
    %v236 = vunpack.c.l.bf16 %v109
    %v237 = vunpack.c.h.bf16 %v109
    %v238 = vunpack.c.l.bf16 %v110
    %v239 = vunpack.c.h.bf16 %v110
    %v240 = vunpack.c.l.bf16 %v111
    %v241 = vunpack.c.h.bf16 %v111
    %v242 = vunpack.c.l.bf16 %v112
    %v243 = vunpack.c.h.bf16 %v112
    %v244 = vunpack.c.l.bf16 %v113
    %v245 = vunpack.c.h.bf16 %v113
    %v246 = vunpack.c.l.bf16 %v114
    %v247 = vunpack.c.h.bf16 %v114
    %v248 = vunpack.c.l.bf16 %v115
    %v249 = vunpack.c.h.bf16 %v115
    %v250 = vunpack.c.l.bf16 %v116
    %v251 = vunpack.c.h.bf16 %v116
    %v252 = vunpack.c.l.bf16 %v117
    %v253 = vunpack.c.h.bf16 %v117
    %v254 = vunpack.c.l.bf16 %v118
    %v255 = vunpack.c.h.bf16 %v118
    %v256 = vunpack.c.l.bf16 %v119
    %v257 = vunpack.c.h.bf16 %v119
    %v258 = vunpack.c.l.bf16 %v120
    %v259 = vunpack.c.h.bf16 %v120
    %v260 = vunpack.c.l.bf16 %v121
    %v261 = vunpack.c.h.bf16 %v121
    %v262 = vunpack.c.l.bf16 %v122
    %v263 = vunpack.c.h.bf16 %v122
    %v264 = vunpack.c.l.bf16 %v123
    %v265 = vunpack.c.h.bf16 %v123
    %v266 = vunpack.c.l.bf16 %v124
    %v267 = vunpack.c.h.bf16 %v124
    %v268 = vunpack.c.l.bf16 %v125
    %v269 = vunpack.c.h.bf16 %v125
    %v270 = vunpack.c.l.bf16 %v126
    %v271 = vunpack.c.h.bf16 %v126
    %v272 = vunpack.c.l.bf16 %v127
    %v273 = vunpack.c.h.bf16 %v127
    %v274 = vunpack.c.l.bf16 %v128
    %v275 = vunpack.c.h.bf16 %v128
    %v276 = vunpack.c.l.bf16 %v129
    %v277 = vunpack.c.h.bf16 %v129
    %v278 = vunpack.c.l.bf16 %v130
    %v279 = vunpack.c.h.bf16 %v130
    %v280 = vunpack.c.l.bf16 %v131
    %v281 = vunpack.c.h.bf16 %v131
    %v282 = vunpack.c.l.bf16 %v132
    %v283 = vunpack.c.h.bf16 %v132
    %v284 = vunpack.c.l.bf16 %v133
    %v285 = vunpack.c.h.bf16 %v133
    %v286 = vunpack.c.l.bf16 %v134
    %v287 = vunpack.c.h.bf16 %v134
    %v288 = vunpack.c.l.bf16 %v135
    %v289 = vunpack.c.h.bf16 %v135
    %v290 = vunpack.c.l.bf16 %v136
    %v291 = vunpack.c.h.bf16 %v136
    %v292 = vunpack.c.l.bf16 %v137
    %v293 = vunpack.c.h.bf16 %v137
    %v294 = vunpack.c.l.bf16 %v138
    %v295 = vunpack.c.h.bf16 %v138
    %v296 = vunpack.c.l.bf16 %v139
    %v297 = vunpack.c.h.bf16 %v139
    %v298 = vunpack.c.l.bf16 %v140
    %v299 = vunpack.c.h.bf16 %v140
    %v300 = vunpack.c.l.bf16 %v141
    %v301 = vunpack.c.h.bf16 %v141
    %v302 = vadd.f32 %v142, %v152
    %v303 = vrot.slane %v302, 4
    %v304 = vadd.f32 %v302, %v303
    %v305 = vrot.slane %v304, 2
    %v306 = vadd.f32 %v304, %v305
    %v307 = vrot.slane %v306, 1
    %v308 = vadd.f32 %v306, %v307
    %v309 = vadd.f32 %v143, %v153
    %v310 = vrot.slane %v309, 4
    %v311 = vadd.f32 %v309, %v310
    %v312 = vrot.slane %v311, 2
    %v313 = vadd.f32 %v311, %v312
    %v314 = vrot.slane %v313, 1
    %v315 = vadd.f32 %v313, %v314
    %v316 = vadd.f32 %v144, %v154
    %v317 = vrot.slane %v316, 4
    %v318 = vadd.f32 %v316, %v317
    %v319 = vrot.slane %v318, 2
    %v320 = vadd.f32 %v318, %v319
    %v321 = vrot.slane %v320, 1
    %v322 = vadd.f32 %v320, %v321
    %v323 = vadd.f32 %v145, %v155
    %v324 = vrot.slane %v323, 4
    %v325 = vadd.f32 %v323, %v324
    %v326 = vrot.slane %v325, 2
    %v327 = vadd.f32 %v325, %v326
    %v328 = vrot.slane %v327, 1
    %v329 = vadd.f32 %v327, %v328
    %v330 = vadd.f32 %v146, %v156
    %v331 = vrot.slane %v330, 4
    %v332 = vadd.f32 %v330, %v331
    %v333 = vrot.slane %v332, 2
    %v334 = vadd.f32 %v332, %v333
    %v335 = vrot.slane %v334, 1
    %v336 = vadd.f32 %v334, %v335
    %v337 = vadd.f32 %v147, %v157
    %v338 = vrot.slane %v337, 4
    %v339 = vadd.f32 %v337, %v338
    %v340 = vrot.slane %v339, 2
    %v341 = vadd.f32 %v339, %v340
    %v342 = vrot.slane %v341, 1
    %v343 = vadd.f32 %v341, %v342
    %v344 = vadd.f32 %v148, %v158
    %v345 = vrot.slane %v344, 4
    %v346 = vadd.f32 %v344, %v345
    %v347 = vrot.slane %v346, 2
    %v348 = vadd.f32 %v346, %v347
    %v349 = vrot.slane %v348, 1
    %v350 = vadd.f32 %v348, %v349
    %v351 = vadd.f32 %v149, %v159
    %v352 = vrot.slane %v351, 4
    %v353 = vadd.f32 %v351, %v352
    %v354 = vrot.slane %v353, 2
    %v355 = vadd.f32 %v353, %v354
    %v356 = vrot.slane %v355, 1
    %v357 = vadd.f32 %v355, %v356
    %v358 = vadd.f32 %v150, %v160
    %v359 = vrot.slane %v358, 4
    %v360 = vadd.f32 %v358, %v359
    %v361 = vrot.slane %v360, 2
    %v362 = vadd.f32 %v360, %v361
    %v363 = vrot.slane %v362, 1
    %v364 = vadd.f32 %v362, %v363
    %v365 = vadd.f32 %v151, %v161
    %v366 = vrot.slane %v365, 4
    %v367 = vadd.f32 %v365, %v366
    %v368 = vrot.slane %v367, 2
    %v369 = vadd.f32 %v367, %v368
    %v370 = vrot.slane %v369, 1
    %v371 = vadd.f32 %v369, %v370
    %v372 = vadd.f32 %v162, %v172
    %v373 = vrot.slane %v372, 4
    %v374 = vadd.f32 %v372, %v373
    %v375 = vrot.slane %v374, 2
    %v376 = vadd.f32 %v374, %v375
    %v377 = vrot.slane %v376, 1
    %v378 = vadd.f32 %v376, %v377
    %v379 = vadd.f32 %v163, %v173
    %v380 = vrot.slane %v379, 4
    %v381 = vadd.f32 %v379, %v380
    %v382 = vrot.slane %v381, 2
    %v383 = vadd.f32 %v381, %v382
    %v384 = vrot.slane %v383, 1
    %v385 = vadd.f32 %v383, %v384
    %v386 = vadd.f32 %v164, %v174
    %v387 = vrot.slane %v386, 4
    %v388 = vadd.f32 %v386, %v387
    %v389 = vrot.slane %v388, 2
    %v390 = vadd.f32 %v388, %v389
    %v391 = vrot.slane %v390, 1
    %v392 = vadd.f32 %v390, %v391
    %v393 = vadd.f32 %v165, %v175
    %v394 = vrot.slane %v393, 4
    %v395 = vadd.f32 %v393, %v394
    %v396 = vrot.slane %v395, 2
    %v397 = vadd.f32 %v395, %v396
    %v398 = vrot.slane %v397, 1
    %v399 = vadd.f32 %v397, %v398
    %v400 = vadd.f32 %v166, %v176
    %v401 = vrot.slane %v400, 4
    %v402 = vadd.f32 %v400, %v401
    %v403 = vrot.slane %v402, 2
    %v404 = vadd.f32 %v402, %v403
    %v405 = vrot.slane %v404, 1
    %v406 = vadd.f32 %v404, %v405
    %v407 = vadd.f32 %v167, %v177
    %v408 = vrot.slane %v407, 4
    %v409 = vadd.f32 %v407, %v408
    %v410 = vrot.slane %v409, 2
    %v411 = vadd.f32 %v409, %v410
    %v412 = vrot.slane %v411, 1
    %v413 = vadd.f32 %v411, %v412
    %v414 = vadd.f32 %v168, %v178
    %v415 = vrot.slane %v414, 4
    %v416 = vadd.f32 %v414, %v415
    %v417 = vrot.slane %v416, 2
    %v418 = vadd.f32 %v416, %v417
    %v419 = vrot.slane %v418, 1
    %v420 = vadd.f32 %v418, %v419
    %v421 = vadd.f32 %v169, %v179
    %v422 = vrot.slane %v421, 4
    %v423 = vadd.f32 %v421, %v422
    %v424 = vrot.slane %v423, 2
    %v425 = vadd.f32 %v423, %v424
    %v426 = vrot.slane %v425, 1
    %v427 = vadd.f32 %v425, %v426
    %v428 = vadd.f32 %v170, %v180
    %v429 = vrot.slane %v428, 4
    %v430 = vadd.f32 %v428, %v429
    %v431 = vrot.slane %v430, 2
    %v432 = vadd.f32 %v430, %v431
    %v433 = vrot.slane %v432, 1
    %v434 = vadd.f32 %v432, %v433
    %v435 = vadd.f32 %v171, %v181
    %v436 = vrot.slane %v435, 4
    %v437 = vadd.f32 %v435, %v436
    %v438 = vrot.slane %v437, 2
    %v439 = vadd.f32 %v437, %v438
    %v440 = vrot.slane %v439, 1
    %v441 = vadd.f32 %v439, %v440
    %v442 = vadd.f32 %v182, %v192
    %v443 = vrot.slane %v442, 4
    %v444 = vadd.f32 %v442, %v443
    %v445 = vrot.slane %v444, 2
    %v446 = vadd.f32 %v444, %v445
    %v447 = vrot.slane %v446, 1
    %v448 = vadd.f32 %v446, %v447
    %v449 = vadd.f32 %v183, %v193
    %v450 = vrot.slane %v449, 4
    %v451 = vadd.f32 %v449, %v450
    %v452 = vrot.slane %v451, 2
    %v453 = vadd.f32 %v451, %v452
    %v454 = vrot.slane %v453, 1
    %v455 = vadd.f32 %v453, %v454
    %v456 = vadd.f32 %v184, %v194
    %v457 = vrot.slane %v456, 4
    %v458 = vadd.f32 %v456, %v457
    %v459 = vrot.slane %v458, 2
    %v460 = vadd.f32 %v458, %v459
    %v461 = vrot.slane %v460, 1
    %v462 = vadd.f32 %v460, %v461
    %v463 = vadd.f32 %v185, %v195
    %v464 = vrot.slane %v463, 4
    %v465 = vadd.f32 %v463, %v464
    %v466 = vrot.slane %v465, 2
    %v467 = vadd.f32 %v465, %v466
    %v468 = vrot.slane %v467, 1
    %v469 = vadd.f32 %v467, %v468
    %v470 = vadd.f32 %v186, %v196
    %v471 = vrot.slane %v470, 4
    %v472 = vadd.f32 %v470, %v471
    %v473 = vrot.slane %v472, 2
    %v474 = vadd.f32 %v472, %v473
    %v475 = vrot.slane %v474, 1
    %v476 = vadd.f32 %v474, %v475
    %v477 = vadd.f32 %v187, %v197
    %v478 = vrot.slane %v477, 4
    %v479 = vadd.f32 %v477, %v478
    %v480 = vrot.slane %v479, 2
    %v481 = vadd.f32 %v479, %v480
    %v482 = vrot.slane %v481, 1
    %v483 = vadd.f32 %v481, %v482
    %v484 = vadd.f32 %v188, %v198
    %v485 = vrot.slane %v484, 4
    %v486 = vadd.f32 %v484, %v485
    %v487 = vrot.slane %v486, 2
    %v488 = vadd.f32 %v486, %v487
    %v489 = vrot.slane %v488, 1
    %v490 = vadd.f32 %v488, %v489
    %v491 = vadd.f32 %v189, %v199
    %v492 = vrot.slane %v491, 4
    %v493 = vadd.f32 %v491, %v492
    %v494 = vrot.slane %v493, 2
    %v495 = vadd.f32 %v493, %v494
    %v496 = vrot.slane %v495, 1
    %v497 = vadd.f32 %v495, %v496
    %v498 = vadd.f32 %v190, %v200
    %v499 = vrot.slane %v498, 4
    %v500 = vadd.f32 %v498, %v499
    %v501 = vrot.slane %v500, 2
    %v502 = vadd.f32 %v500, %v501
    %v503 = vrot.slane %v502, 1
    %v504 = vadd.f32 %v502, %v503
    %v505 = vadd.f32 %v191, %v201
    %v506 = vrot.slane %v505, 4
    %v507 = vadd.f32 %v505, %v506
    %v508 = vrot.slane %v507, 2
    %v509 = vadd.f32 %v507, %v508
    %v510 = vrot.slane %v509, 1
    %v511 = vadd.f32 %v509, %v510
    %v512 = vadd.f32 %v202, %v212
    %v513 = vrot.slane %v512, 4
    %v514 = vadd.f32 %v512, %v513
    %v515 = vrot.slane %v514, 2
    %v516 = vadd.f32 %v514, %v515
    %v517 = vrot.slane %v516, 1
    %v518 = vadd.f32 %v516, %v517
    %v519 = vadd.f32 %v203, %v213
    %v520 = vrot.slane %v519, 4
    %v521 = vadd.f32 %v519, %v520
    %v522 = vrot.slane %v521, 2
    %v523 = vadd.f32 %v521, %v522
    %v524 = vrot.slane %v523, 1
    %v525 = vadd.f32 %v523, %v524
    %v526 = vadd.f32 %v204, %v214
    %v527 = vrot.slane %v526, 4
    %v528 = vadd.f32 %v526, %v527
    %v529 = vrot.slane %v528, 2
    %v530 = vadd.f32 %v528, %v529
    %v531 = vrot.slane %v530, 1
    %v532 = vadd.f32 %v530, %v531
    %v533 = vadd.f32 %v205, %v215
    %v534 = vrot.slane %v533, 4
    %v535 = vadd.f32 %v533, %v534
    %v536 = vrot.slane %v535, 2
    %v537 = vadd.f32 %v535, %v536
    %v538 = vrot.slane %v537, 1
    %v539 = vadd.f32 %v537, %v538
    %v540 = vadd.f32 %v206, %v216
    %v541 = vrot.slane %v540, 4
    %v542 = vadd.f32 %v540, %v541
    %v543 = vrot.slane %v542, 2
    %v544 = vadd.f32 %v542, %v543
    %v545 = vrot.slane %v544, 1
    %v546 = vadd.f32 %v544, %v545
    %v547 = vadd.f32 %v207, %v217
    %v548 = vrot.slane %v547, 4
    %v549 = vadd.f32 %v547, %v548
    %v550 = vrot.slane %v549, 2
    %v551 = vadd.f32 %v549, %v550
    %v552 = vrot.slane %v551, 1
    %v553 = vadd.f32 %v551, %v552
    %v554 = vadd.f32 %v208, %v218
    %v555 = vrot.slane %v554, 4
    %v556 = vadd.f32 %v554, %v555
    %v557 = vrot.slane %v556, 2
    %v558 = vadd.f32 %v556, %v557
    %v559 = vrot.slane %v558, 1
    %v560 = vadd.f32 %v558, %v559
    %v561 = vadd.f32 %v209, %v219
    %v562 = vrot.slane %v561, 4
    %v563 = vadd.f32 %v561, %v562
    %v564 = vrot.slane %v563, 2
    %v565 = vadd.f32 %v563, %v564
    %v566 = vrot.slane %v565, 1
    %v567 = vadd.f32 %v565, %v566
    %v568 = vadd.f32 %v210, %v220
    %v569 = vrot.slane %v568, 4
    %v570 = vadd.f32 %v568, %v569
    %v571 = vrot.slane %v570, 2
    %v572 = vadd.f32 %v570, %v571
    %v573 = vrot.slane %v572, 1
    %v574 = vadd.f32 %v572, %v573
    %v575 = vadd.f32 %v211, %v221
    %v576 = vrot.slane %v575, 4
    %v577 = vadd.f32 %v575, %v576
    %v578 = vrot.slane %v577, 2
    %v579 = vadd.f32 %v577, %v578
    %v580 = vrot.slane %v579, 1
    %v581 = vadd.f32 %v579, %v580
    %v582 = vadd.f32 %v222, %v232
    %v583 = vrot.slane %v582, 4
    %v584 = vadd.f32 %v582, %v583
    %v585 = vrot.slane %v584, 2
    %v586 = vadd.f32 %v584, %v585
    %v587 = vrot.slane %v586, 1
    %v588 = vadd.f32 %v586, %v587
    %v589 = vadd.f32 %v223, %v233
    %v590 = vrot.slane %v589, 4
    %v591 = vadd.f32 %v589, %v590
    %v592 = vrot.slane %v591, 2
    %v593 = vadd.f32 %v591, %v592
    %v594 = vrot.slane %v593, 1
    %v595 = vadd.f32 %v593, %v594
    %v596 = vadd.f32 %v224, %v234
    %v597 = vrot.slane %v596, 4
    %v598 = vadd.f32 %v596, %v597
    %v599 = vrot.slane %v598, 2
    %v600 = vadd.f32 %v598, %v599
    %v601 = vrot.slane %v600, 1
    %v602 = vadd.f32 %v600, %v601
    %v603 = vadd.f32 %v225, %v235
    %v604 = vrot.slane %v603, 4
    %v605 = vadd.f32 %v603, %v604
    %v606 = vrot.slane %v605, 2
    %v607 = vadd.f32 %v605, %v606
    %v608 = vrot.slane %v607, 1
    %v609 = vadd.f32 %v607, %v608
    %v610 = vadd.f32 %v226, %v236
    %v611 = vrot.slane %v610, 4
    %v612 = vadd.f32 %v610, %v611
    %v613 = vrot.slane %v612, 2
    %v614 = vadd.f32 %v612, %v613
    %v615 = vrot.slane %v614, 1
    %v616 = vadd.f32 %v614, %v615
    %v617 = vadd.f32 %v227, %v237
    %v618 = vrot.slane %v617, 4
    %v619 = vadd.f32 %v617, %v618
    %v620 = vrot.slane %v619, 2
    %v621 = vadd.f32 %v619, %v620
    %v622 = vrot.slane %v621, 1
    %v623 = vadd.f32 %v621, %v622
    %v624 = vadd.f32 %v228, %v238
    %v625 = vrot.slane %v624, 4
    %v626 = vadd.f32 %v624, %v625
    %v627 = vrot.slane %v626, 2
    %v628 = vadd.f32 %v626, %v627
    %v629 = vrot.slane %v628, 1
    %v630 = vadd.f32 %v628, %v629
    %v631 = vadd.f32 %v229, %v239
    %v632 = vrot.slane %v631, 4
    %v633 = vadd.f32 %v631, %v632
    %v634 = vrot.slane %v633, 2
    %v635 = vadd.f32 %v633, %v634
    %v636 = vrot.slane %v635, 1
    %v637 = vadd.f32 %v635, %v636
    %v638 = vadd.f32 %v230, %v240
    %v639 = vrot.slane %v638, 4
    %v640 = vadd.f32 %v638, %v639
    %v641 = vrot.slane %v640, 2
    %v642 = vadd.f32 %v640, %v641
    %v643 = vrot.slane %v642, 1
    %v644 = vadd.f32 %v642, %v643
    %v645 = vadd.f32 %v231, %v241
    %v646 = vrot.slane %v645, 4
    %v647 = vadd.f32 %v645, %v646
    %v648 = vrot.slane %v647, 2
    %v649 = vadd.f32 %v647, %v648
    %v650 = vrot.slane %v649, 1
    %v651 = vadd.f32 %v649, %v650
    %v652 = vadd.f32 %v242, %v252
    %v653 = vrot.slane %v652, 4
    %v654 = vadd.f32 %v652, %v653
    %v655 = vrot.slane %v654, 2
    %v656 = vadd.f32 %v654, %v655
    %v657 = vrot.slane %v656, 1
    %v658 = vadd.f32 %v656, %v657
    %v659 = vadd.f32 %v243, %v253
    %v660 = vrot.slane %v659, 4
    %v661 = vadd.f32 %v659, %v660
    %v662 = vrot.slane %v661, 2
    %v663 = vadd.f32 %v661, %v662
    %v664 = vrot.slane %v663, 1
    %v665 = vadd.f32 %v663, %v664
    %v666 = vadd.f32 %v244, %v254
    %v667 = vrot.slane %v666, 4
    %v668 = vadd.f32 %v666, %v667
    %v669 = vrot.slane %v668, 2
    %v670 = vadd.f32 %v668, %v669
    %v671 = vrot.slane %v670, 1
    %v672 = vadd.f32 %v670, %v671
    %v673 = vadd.f32 %v245, %v255
    %v674 = vrot.slane %v673, 4
    %v675 = vadd.f32 %v673, %v674
    %v676 = vrot.slane %v675, 2
    %v677 = vadd.f32 %v675, %v676
    %v678 = vrot.slane %v677, 1
    %v679 = vadd.f32 %v677, %v678
    %v680 = vadd.f32 %v246, %v256
    %v681 = vrot.slane %v680, 4
    %v682 = vadd.f32 %v680, %v681
    %v683 = vrot.slane %v682, 2
    %v684 = vadd.f32 %v682, %v683
    %v685 = vrot.slane %v684, 1
    %v686 = vadd.f32 %v684, %v685
    %v687 = vadd.f32 %v247, %v257
    %v688 = vrot.slane %v687, 4
    %v689 = vadd.f32 %v687, %v688
    %v690 = vrot.slane %v689, 2
    %v691 = vadd.f32 %v689, %v690
    %v692 = vrot.slane %v691, 1
    %v693 = vadd.f32 %v691, %v692
    %v694 = vadd.f32 %v248, %v258
    %v695 = vrot.slane %v694, 4
    %v696 = vadd.f32 %v694, %v695
    %v697 = vrot.slane %v696, 2
    %v698 = vadd.f32 %v696, %v697
    %v699 = vrot.slane %v698, 1
    %v700 = vadd.f32 %v698, %v699
    %v701 = vadd.f32 %v249, %v259
    %v702 = vrot.slane %v701, 4
    %v703 = vadd.f32 %v701, %v702
    %v704 = vrot.slane %v703, 2
    %v705 = vadd.f32 %v703, %v704
    %v706 = vrot.slane %v705, 1
    %v707 = vadd.f32 %v705, %v706
    %v708 = vadd.f32 %v250, %v260
    %v709 = vrot.slane %v708, 4
    %v710 = vadd.f32 %v708, %v709
    %v711 = vrot.slane %v710, 2
    %v712 = vadd.f32 %v710, %v711
    %v713 = vrot.slane %v712, 1
    %v714 = vadd.f32 %v712, %v713
    %v715 = vadd.f32 %v251, %v261
    %v716 = vrot.slane %v715, 4
    %v717 = vadd.f32 %v715, %v716
    %v718 = vrot.slane %v717, 2
    %v719 = vadd.f32 %v717, %v718
    %v720 = vrot.slane %v719, 1
    %v721 = vadd.f32 %v719, %v720
    %v722 = vadd.f32 %v262, %v272
    %v723 = vrot.slane %v722, 4
    %v724 = vadd.f32 %v722, %v723
    %v725 = vrot.slane %v724, 2
    %v726 = vadd.f32 %v724, %v725
    %v727 = vrot.slane %v726, 1
    %v728 = vadd.f32 %v726, %v727
    %v729 = vadd.f32 %v263, %v273
    %v730 = vrot.slane %v729, 4
    %v731 = vadd.f32 %v729, %v730
    %v732 = vrot.slane %v731, 2
    %v733 = vadd.f32 %v731, %v732
    %v734 = vrot.slane %v733, 1
    %v735 = vadd.f32 %v733, %v734
    %v736 = vadd.f32 %v264, %v274
    %v737 = vrot.slane %v736, 4
    %v738 = vadd.f32 %v736, %v737
    %v739 = vrot.slane %v738, 2
    %v740 = vadd.f32 %v738, %v739
    %v741 = vrot.slane %v740, 1
    %v742 = vadd.f32 %v740, %v741
    %v743 = vadd.f32 %v265, %v275
    %v744 = vrot.slane %v743, 4
    %v745 = vadd.f32 %v743, %v744
    %v746 = vrot.slane %v745, 2
    %v747 = vadd.f32 %v745, %v746
    %v748 = vrot.slane %v747, 1
    %v749 = vadd.f32 %v747, %v748
    %v750 = vadd.f32 %v266, %v276
    %v751 = vrot.slane %v750, 4
    %v752 = vadd.f32 %v750, %v751
    %v753 = vrot.slane %v752, 2
    %v754 = vadd.f32 %v752, %v753
    %v755 = vrot.slane %v754, 1
    %v756 = vadd.f32 %v754, %v755
    %v757 = vadd.f32 %v267, %v277
    %v758 = vrot.slane %v757, 4
    %v759 = vadd.f32 %v757, %v758
    %v760 = vrot.slane %v759, 2
    %v761 = vadd.f32 %v759, %v760
    %v762 = vrot.slane %v761, 1
    %v763 = vadd.f32 %v761, %v762
    %v764 = vadd.f32 %v268, %v278
    %v765 = vrot.slane %v764, 4
    %v766 = vadd.f32 %v764, %v765
    %v767 = vrot.slane %v766, 2
    %v768 = vadd.f32 %v766, %v767
    %v769 = vrot.slane %v768, 1
    %v770 = vadd.f32 %v768, %v769
    %v771 = vadd.f32 %v269, %v279
    %v772 = vrot.slane %v771, 4
    %v773 = vadd.f32 %v771, %v772
    %v774 = vrot.slane %v773, 2
    %v775 = vadd.f32 %v773, %v774
    %v776 = vrot.slane %v775, 1
    %v777 = vadd.f32 %v775, %v776
    %v778 = vadd.f32 %v270, %v280
    %v779 = vrot.slane %v778, 4
    %v780 = vadd.f32 %v778, %v779
    %v781 = vrot.slane %v780, 2
    %v782 = vadd.f32 %v780, %v781
    %v783 = vrot.slane %v782, 1
    %v784 = vadd.f32 %v782, %v783
    %v785 = vadd.f32 %v271, %v281
    %v786 = vrot.slane %v785, 4
    %v787 = vadd.f32 %v785, %v786
    %v788 = vrot.slane %v787, 2
    %v789 = vadd.f32 %v787, %v788
    %v790 = vrot.slane %v789, 1
    %v791 = vadd.f32 %v789, %v790
    %v792 = vadd.f32 %v282, %v292
    %v793 = vrot.slane %v792, 4
    %v794 = vadd.f32 %v792, %v793
    %v795 = vrot.slane %v794, 2
    %v796 = vadd.f32 %v794, %v795
    %v797 = vrot.slane %v796, 1
    %v798 = vadd.f32 %v796, %v797
    %v799 = vadd.f32 %v283, %v293
    %v800 = vrot.slane %v799, 4
    %v801 = vadd.f32 %v799, %v800
    %v802 = vrot.slane %v801, 2
    %v803 = vadd.f32 %v801, %v802
    %v804 = vrot.slane %v803, 1
    %v805 = vadd.f32 %v803, %v804
    %v806 = vadd.f32 %v284, %v294
    %v807 = vrot.slane %v806, 4
    %v808 = vadd.f32 %v806, %v807
    %v809 = vrot.slane %v808, 2
    %v810 = vadd.f32 %v808, %v809
    %v811 = vrot.slane %v810, 1
    %v812 = vadd.f32 %v810, %v811
    %v813 = vadd.f32 %v285, %v295
    %v814 = vrot.slane %v813, 4
    %v815 = vadd.f32 %v813, %v814
    %v816 = vrot.slane %v815, 2
    %v817 = vadd.f32 %v815, %v816
    %v818 = vrot.slane %v817, 1
    %v819 = vadd.f32 %v817, %v818
    %v820 = vadd.f32 %v286, %v296
    %v821 = vrot.slane %v820, 4
    %v822 = vadd.f32 %v820, %v821
    %v823 = vrot.slane %v822, 2
    %v824 = vadd.f32 %v822, %v823
    %v825 = vrot.slane %v824, 1
    %v826 = vadd.f32 %v824, %v825
    %v827 = vadd.f32 %v287, %v297
    %v828 = vrot.slane %v827, 4
    %v829 = vadd.f32 %v827, %v828
    %v830 = vrot.slane %v829, 2
    %v831 = vadd.f32 %v829, %v830
    %v832 = vrot.slane %v831, 1
    %v833 = vadd.f32 %v831, %v832
    %v834 = vadd.f32 %v288, %v298
    %v835 = vrot.slane %v834, 4
    %v836 = vadd.f32 %v834, %v835
    %v837 = vrot.slane %v836, 2
    %v838 = vadd.f32 %v836, %v837
    %v839 = vrot.slane %v838, 1
    %v840 = vadd.f32 %v838, %v839
    %v841 = vadd.f32 %v289, %v299
    %v842 = vrot.slane %v841, 4
    %v843 = vadd.f32 %v841, %v842
    %v844 = vrot.slane %v843, 2
    %v845 = vadd.f32 %v843, %v844
    %v846 = vrot.slane %v845, 1
    %v847 = vadd.f32 %v845, %v846
    %v848 = vadd.f32 %v290, %v300
    %v849 = vrot.slane %v848, 4
    %v850 = vadd.f32 %v848, %v849
    %v851 = vrot.slane %v850, 2
    %v852 = vadd.f32 %v850, %v851
    %v853 = vrot.slane %v852, 1
    %v854 = vadd.f32 %v852, %v853
    %v855 = vadd.f32 %v291, %v301
    %v856 = vrot.slane %v855, 4
    %v857 = vadd.f32 %v855, %v856
    %v858 = vrot.slane %v857, 2
    %v859 = vadd.f32 %v857, %v858
    %v860 = vrot.slane %v859, 1
    %v861 = vadd.f32 %v859, %v860
    %v862 = vrcp.pop 16.0
    %v863 = vmul.f32 %v308, %v862
    %v864 = vmul.f32 %v315, %v862
    %v865 = vmul.f32 %v322, %v862
    %v866 = vmul.f32 %v329, %v862
    %v867 = vmul.f32 %v336, %v862
    %v868 = vmul.f32 %v343, %v862
    %v869 = vmul.f32 %v350, %v862
    %v870 = vmul.f32 %v357, %v862
    %v871 = vmul.f32 %v364, %v862
    %v872 = vmul.f32 %v371, %v862
    %v873 = vmul.f32 %v378, %v862
    %v874 = vmul.f32 %v385, %v862
    %v875 = vmul.f32 %v392, %v862
    %v876 = vmul.f32 %v399, %v862
    %v877 = vmul.f32 %v406, %v862
    %v878 = vmul.f32 %v413, %v862
    %v879 = vmul.f32 %v420, %v862
    %v880 = vmul.f32 %v427, %v862
    %v881 = vmul.f32 %v434, %v862
    %v882 = vmul.f32 %v441, %v862
    %v883 = vmul.f32 %v448, %v862
    %v884 = vmul.f32 %v455, %v862
    %v885 = vmul.f32 %v462, %v862
    %v886 = vmul.f32 %v469, %v862
    %v887 = vmul.f32 %v476, %v862
    %v888 = vmul.f32 %v483, %v862
    %v889 = vmul.f32 %v490, %v862
    %v890 = vmul.f32 %v497, %v862
    %v891 = vmul.f32 %v504, %v862
    %v892 = vmul.f32 %v511, %v862
    %v893 = vmul.f32 %v518, %v862
    %v894 = vmul.f32 %v525, %v862
    %v895 = vmul.f32 %v532, %v862
    %v896 = vmul.f32 %v539, %v862
    %v897 = vmul.f32 %v546, %v862
    %v898 = vmul.f32 %v553, %v862
    %v899 = vmul.f32 %v560, %v862
    %v900 = vmul.f32 %v567, %v862
    %v901 = vmul.f32 %v574, %v862
    %v902 = vmul.f32 %v581, %v862
    %v903 = vmul.f32 %v588, %v862
    %v904 = vmul.f32 %v595, %v862
    %v905 = vmul.f32 %v602, %v862
    %v906 = vmul.f32 %v609, %v862
    %v907 = vmul.f32 %v616, %v862
    %v908 = vmul.f32 %v623, %v862
    %v909 = vmul.f32 %v630, %v862
    %v910 = vmul.f32 %v637, %v862
    %v911 = vmul.f32 %v644, %v862
    %v912 = vmul.f32 %v651, %v862
    %v913 = vmul.f32 %v658, %v862
    %v914 = vmul.f32 %v665, %v862
    %v915 = vmul.f32 %v672, %v862
    %v916 = vmul.f32 %v679, %v862
    %v917 = vmul.f32 %v686, %v862
    %v918 = vmul.f32 %v693, %v862
    %v919 = vmul.f32 %v700, %v862
    %v920 = vmul.f32 %v707, %v862
    %v921 = vmul.f32 %v714, %v862
    %v922 = vmul.f32 %v721, %v862
    %v923 = vmul.f32 %v728, %v862
    %v924 = vmul.f32 %v735, %v862
    %v925 = vmul.f32 %v742, %v862
    %v926 = vmul.f32 %v749, %v862
    %v927 = vmul.f32 %v756, %v862
    %v928 = vmul.f32 %v763, %v862
    %v929 = vmul.f32 %v770, %v862
    %v930 = vmul.f32 %v777, %v862
    %v931 = vmul.f32 %v784, %v862
    %v932 = vmul.f32 %v791, %v862
    %v933 = vmul.f32 %v798, %v862
    %v934 = vmul.f32 %v805, %v862
    %v935 = vmul.f32 %v812, %v862
    %v936 = vmul.f32 %v819, %v862
    %v937 = vmul.f32 %v826, %v862
    %v938 = vmul.f32 %v833, %v862
    %v939 = vmul.f32 %v840, %v862
    %v940 = vmul.f32 %v847, %v862
    %v941 = vmul.f32 %v854, %v862
    %v942 = vmul.f32 %v861, %v862
    %v943 = vpack.c.bf16 %v863, %v863
    %v944 = vpack.c.bf16 %v864, %v864
    %v945 = vpack.c.bf16 %v865, %v865
    %v946 = vpack.c.bf16 %v866, %v866
    %v947 = vpack.c.bf16 %v867, %v867
    %v948 = vpack.c.bf16 %v868, %v868
    %v949 = vpack.c.bf16 %v869, %v869
    %v950 = vpack.c.bf16 %v870, %v870
    %v951 = vpack.c.bf16 %v871, %v871
    %v952 = vpack.c.bf16 %v872, %v872
    %v953 = vpack.c.bf16 %v873, %v873
    %v954 = vpack.c.bf16 %v874, %v874
    %v955 = vpack.c.bf16 %v875, %v875
    %v956 = vpack.c.bf16 %v876, %v876
    %v957 = vpack.c.bf16 %v877, %v877
    %v958 = vpack.c.bf16 %v878, %v878
    %v959 = vpack.c.bf16 %v879, %v879
    %v960 = vpack.c.bf16 %v880, %v880
    %v961 = vpack.c.bf16 %v881, %v881
    %v962 = vpack.c.bf16 %v882, %v882
    %v963 = vpack.c.bf16 %v883, %v883
    %v964 = vpack.c.bf16 %v884, %v884
    %v965 = vpack.c.bf16 %v885, %v885
    %v966 = vpack.c.bf16 %v886, %v886
    %v967 = vpack.c.bf16 %v887, %v887
    %v968 = vpack.c.bf16 %v888, %v888
    %v969 = vpack.c.bf16 %v889, %v889
    %v970 = vpack.c.bf16 %v890, %v890
    %v971 = vpack.c.bf16 %v891, %v891
    %v972 = vpack.c.bf16 %v892, %v892
    %v973 = vpack.c.bf16 %v893, %v893
    %v974 = vpack.c.bf16 %v894, %v894
    %v975 = vpack.c.bf16 %v895, %v895
    %v976 = vpack.c.bf16 %v896, %v896
    %v977 = vpack.c.bf16 %v897, %v897
    %v978 = vpack.c.bf16 %v898, %v898
    %v979 = vpack.c.bf16 %v899, %v899
    %v980 = vpack.c.bf16 %v900, %v900
    %v981 = vpack.c.bf16 %v901, %v901
    %v982 = vpack.c.bf16 %v902, %v902
    %v983 = vpack.c.bf16 %v903, %v903
    %v984 = vpack.c.bf16 %v904, %v904
    %v985 = vpack.c.bf16 %v905, %v905
    %v986 = vpack.c.bf16 %v906, %v906
    %v987 = vpack.c.bf16 %v907, %v907
    %v988 = vpack.c.bf16 %v908, %v908
    %v989 = vpack.c.bf16 %v909, %v909
    %v990 = vpack.c.bf16 %v910, %v910
    %v991 = vpack.c.bf16 %v911, %v911
    %v992 = vpack.c.bf16 %v912, %v912
    %v993 = vpack.c.bf16 %v913, %v913
    %v994 = vpack.c.bf16 %v914, %v914
    %v995 = vpack.c.bf16 %v915, %v915
    %v996 = vpack.c.bf16 %v916, %v916
    %v997 = vpack.c.bf16 %v917, %v917
    %v998 = vpack.c.bf16 %v918, %v918
    %v999 = vpack.c.bf16 %v919, %v919
    %v1000 = vpack.c.bf16 %v920, %v920
    %v1001 = vpack.c.bf16 %v921, %v921
    %v1002 = vpack.c.bf16 %v922, %v922
    %v1003 = vpack.c.bf16 %v923, %v923
    %v1004 = vpack.c.bf16 %v924, %v924
    %v1005 = vpack.c.bf16 %v925, %v925
    %v1006 = vpack.c.bf16 %v926, %v926
    %v1007 = vpack.c.bf16 %v927, %v927
    %v1008 = vpack.c.bf16 %v928, %v928
    %v1009 = vpack.c.bf16 %v929, %v929
    %v1010 = vpack.c.bf16 %v930, %v930
    %v1011 = vpack.c.bf16 %v931, %v931
    %v1012 = vpack.c.bf16 %v932, %v932
    %v1013 = vpack.c.bf16 %v933, %v933
    %v1014 = vpack.c.bf16 %v934, %v934
    %v1015 = vpack.c.bf16 %v935, %v935
    %v1016 = vpack.c.bf16 %v936, %v936
    %v1017 = vpack.c.bf16 %v937, %v937
    %v1018 = vpack.c.bf16 %v938, %v938
    %v1019 = vpack.c.bf16 %v939, %v939
    %v1020 = vpack.c.bf16 %v940, %v940
    %v1021 = vpack.c.bf16 %v941, %v941
    %v1022 = vpack.c.bf16 %v942, %v942
    %v1023 = vld [vmem:[#allocation5] sm:$0xff]
    %v1024 = vld [vmem:[#allocation5 + $0x8] sm:$0xff]
    %v1025 = vld [vmem:[#allocation5 + $0x10] sm:$0xff]
    %v1026 = vld [vmem:[#allocation5 + $0x18] sm:$0xff]
    %v1027 = vld [vmem:[#allocation5 + $0x20] sm:$0xff]
    %v1028 = vld [vmem:[#allocation5 + $0x28] sm:$0xff]
    %v1029 = vld [vmem:[#allocation5 + $0x30] sm:$0xff]
    %v1030 = vld [vmem:[#allocation5 + $0x38] sm:$0xff]
    %v1031 = vld [vmem:[#allocation5 + $0x40] sm:$0xff]
    %v1032 = vld [vmem:[#allocation5 + $0x48] sm:$0xff]
    %v1033 = vld [vmem:[#allocation5 + $0x50] sm:$0xff]
    %v1034 = vld [vmem:[#allocation5 + $0x58] sm:$0xff]
    %v1035 = vld [vmem:[#allocation5 + $0x60] sm:$0xff]
    %v1036 = vld [vmem:[#allocation5 + $0x68] sm:$0xff]
    %v1037 = vld [vmem:[#allocation5 + $0x70] sm:$0xff]
    %v1038 = vld [vmem:[#allocation5 + $0x78] sm:$0xff]
    %v1039 = vld [vmem:[#allocation5 + $0x80] sm:$0xff]
    %v1040 = vld [vmem:[#allocation5 + $0x88] sm:$0xff]
    %v1041 = vld [vmem:[#allocation5 + $0x90] sm:$0xff]
    %v1042 = vld [vmem:[#allocation5 + $0x98] sm:$0xff]
    %v1043 = vld [vmem:[#allocation5 + $0xa0] sm:$0xff]
    %v1044 = vld [vmem:[#allocation5 + $0xa8] sm:$0xff]
    %v1045 = vld [vmem:[#allocation5 + $0xb0] sm:$0xff]
    %v1046 = vld [vmem:[#allocation5 + $0xb8] sm:$0xff]
    %v1047 = vld [vmem:[#allocation5 + $0xc0] sm:$0xff]
    %v1048 = vld [vmem:[#allocation5 + $0xc8] sm:$0xff]
    %v1049 = vld [vmem:[#allocation5 + $0xd0] sm:$0xff]
    %v1050 = vld [vmem:[#allocation5 + $0xd8] sm:$0xff]
    %v1051 = vld [vmem:[#allocation5 + $0xe0] sm:$0xff]
    %v1052 = vld [vmem:[#allocation5 + $0xe8] sm:$0xff]
    %v1053 = vld [vmem:[#allocation5 + $0xf0] sm:$0xff]
    %v1054 = vld [vmem:[#allocation5 + $0xf8] sm:$0xff]
    %v1055 = vld [vmem:[#allocation5 + $0x100] sm:$0xff]
    %v1056 = vld [vmem:[#allocation5 + $0x108] sm:$0xff]
    %v1057 = vld [vmem:[#allocation5 + $0x110] sm:$0xff]
    %v1058 = vld [vmem:[#allocation5 + $0x118] sm:$0xff]
    %v1059 = vld [vmem:[#allocation5 + $0x120] sm:$0xff]
    %v1060 = vld [vmem:[#allocation5 + $0x128] sm:$0xff]
    %v1061 = vld [vmem:[#allocation5 + $0x130] sm:$0xff]
    %v1062 = vld [vmem:[#allocation5 + $0x138] sm:$0xff]
    %v1063 = vld [vmem:[#allocation5 + $0x140] sm:$0xff]
    %v1064 = vld [vmem:[#allocation5 + $0x148] sm:$0xff]
    %v1065 = vld [vmem:[#allocation5 + $0x150] sm:$0xff]
    %v1066 = vld [vmem:[#allocation5 + $0x158] sm:$0xff]
    %v1067 = vld [vmem:[#allocation5 + $0x160] sm:$0xff]
    %v1068 = vld [vmem:[#allocation5 + $0x168] sm:$0xff]
    %v1069 = vld [vmem:[#allocation5 + $0x170] sm:$0xff]
    %v1070 = vld [vmem:[#allocation5 + $0x178] sm:$0xff]
    %v1071 = vld [vmem:[#allocation5 + $0x180] sm:$0xff]
    %v1072 = vld [vmem:[#allocation5 + $0x188] sm:$0xff]
    %v1073 = vld [vmem:[#allocation5 + $0x190] sm:$0xff]
    %v1074 = vld [vmem:[#allocation5 + $0x198] sm:$0xff]
    %v1075 = vld [vmem:[#allocation5 + $0x1a0] sm:$0xff]
    %v1076 = vld [vmem:[#allocation5 + $0x1a8] sm:$0xff]
    %v1077 = vld [vmem:[#allocation5 + $0x1b0] sm:$0xff]
    %v1078 = vld [vmem:[#allocation5 + $0x1b8] sm:$0xff]
    %v1079 = vld [vmem:[#allocation5 + $0x1c0] sm:$0xff]
    %v1080 = vld [vmem:[#allocation5 + $0x1c8] sm:$0xff]
    %v1081 = vld [vmem:[#allocation5 + $0x1d0] sm:$0xff]
    %v1082 = vld [vmem:[#allocation5 + $0x1d8] sm:$0xff]
    %v1083 = vld [vmem:[#allocation5 + $0x1e0] sm:$0xff]
    %v1084 = vld [vmem:[#allocation5 + $0x1e8] sm:$0xff]
    %v1085 = vld [vmem:[#allocation5 + $0x1f0] sm:$0xff]
    %v1086 = vld [vmem:[#allocation5 + $0x1f8] sm:$0xff]
    %v1087 = vld [vmem:[#allocation5 + $0x200] sm:$0xff]
    %v1088 = vld [vmem:[#allocation5 + $0x208] sm:$0xff]
    %v1089 = vld [vmem:[#allocation5 + $0x210] sm:$0xff]
    %v1090 = vld [vmem:[#allocation5 + $0x218] sm:$0xff]
    %v1091 = vld [vmem:[#allocation5 + $0x220] sm:$0xff]
    %v1092 = vld [vmem:[#allocation5 + $0x228] sm:$0xff]
    %v1093 = vld [vmem:[#allocation5 + $0x230] sm:$0xff]
    %v1094 = vld [vmem:[#allocation5 + $0x238] sm:$0xff]
    %v1095 = vld [vmem:[#allocation5 + $0x240] sm:$0xff]
    %v1096 = vld [vmem:[#allocation5 + $0x248] sm:$0xff]
    %v1097 = vld [vmem:[#allocation5 + $0x250] sm:$0xff]
    %v1098 = vld [vmem:[#allocation5 + $0x258] sm:$0xff]
    %v1099 = vld [vmem:[#allocation5 + $0x260] sm:$0xff]
    %v1100 = vld [vmem:[#allocation5 + $0x268] sm:$0xff]
    %v1101 = vld [vmem:[#allocation5 + $0x270] sm:$0xff]
    %v1102 = vld [vmem:[#allocation5 + $0x278] sm:$0xff]
    %v1103 = vld [vmem:[#allocation5 + $0x280] sm:$0xff]
    %v1104 = vld [vmem:[#allocation5 + $0x288] sm:$0xff]
    %v1105 = vld [vmem:[#allocation5 + $0x290] sm:$0xff]
    %v1106 = vld [vmem:[#allocation5 + $0x298] sm:$0xff]
    %v1107 = vld [vmem:[#allocation5 + $0x2a0] sm:$0xff]
    %v1108 = vld [vmem:[#allocation5 + $0x2a8] sm:$0xff]
    %v1109 = vld [vmem:[#allocation5 + $0x2b0] sm:$0xff]
    %v1110 = vld [vmem:[#allocation5 + $0x2b8] sm:$0xff]
    %v1111 = vld [vmem:[#allocation5 + $0x2c0] sm:$0xff]
    %v1112 = vld [vmem:[#allocation5 + $0x2c8] sm:$0xff]
    %v1113 = vld [vmem:[#allocation5 + $0x2d0] sm:$0xff]
    %v1114 = vld [vmem:[#allocation5 + $0x2d8] sm:$0xff]
    %v1115 = vld [vmem:[#allocation5 + $0x2e0] sm:$0xff]
    %v1116 = vld [vmem:[#allocation5 + $0x2e8] sm:$0xff]
    %v1117 = vld [vmem:[#allocation5 + $0x2f0] sm:$0xff]
    %v1118 = vld [vmem:[#allocation5 + $0x2f8] sm:$0xff]
    %v1119 = vld [vmem:[#allocation5 + $0x300] sm:$0xff]
    %v1120 = vld [vmem:[#allocation5 + $0x308] sm:$0xff]
    %v1121 = vld [vmem:[#allocation5 + $0x310] sm:$0xff]
    %v1122 = vld [vmem:[#allocation5 + $0x318] sm:$0xff]
    %v1123 = vld [vmem:[#allocation5 + $0x320] sm:$0xff]
    %v1124 = vld [vmem:[#allocation5 + $0x328] sm:$0xff]
    %v1125 = vld [vmem:[#allocation5 + $0x330] sm:$0xff]
    %v1126 = vld [vmem:[#allocation5 + $0x338] sm:$0xff]
    %v1127 = vld [vmem:[#allocation5 + $0x340] sm:$0xff]
    %v1128 = vld [vmem:[#allocation5 + $0x348] sm:$0xff]
    %v1129 = vld [vmem:[#allocation5 + $0x350] sm:$0xff]
    %v1130 = vld [vmem:[#allocation5 + $0x358] sm:$0xff]
    %v1131 = vld [vmem:[#allocation5 + $0x360] sm:$0xff]
    %v1132 = vld [vmem:[#allocation5 + $0x368] sm:$0xff]
    %v1133 = vld [vmem:[#allocation5 + $0x370] sm:$0xff]
    %v1134 = vld [vmem:[#allocation5 + $0x378] sm:$0xff]
    %v1135 = vld [vmem:[#allocation5 + $0x380] sm:$0xff]
    %v1136 = vld [vmem:[#allocation5 + $0x388] sm:$0xff]
    %v1137 = vld [vmem:[#allocation5 + $0x390] sm:$0xff]
    %v1138 = vld [vmem:[#allocation5 + $0x398] sm:$0xff]
    %v1139 = vld [vmem:[#allocation5 + $0x3a0] sm:$0xff]
    %v1140 = vld [vmem:[#allocation5 + $0x3a8] sm:$0xff]
    %v1141 = vld [vmem:[#allocation5 + $0x3b0] sm:$0xff]
    %v1142 = vld [vmem:[#allocation5 + $0x3b8] sm:$0xff]
    %v1143 = vld [vmem:[#allocation5 + $0x3c0] sm:$0xff]
    %v1144 = vld [vmem:[#allocation5 + $0x3c8] sm:$0xff]
    %v1145 = vld [vmem:[#allocation5 + $0x3d0] sm:$0xff]
    %v1146 = vld [vmem:[#allocation5 + $0x3d8] sm:$0xff]
    %v1147 = vld [vmem:[#allocation5 + $0x3e0] sm:$0xff]
    %v1148 = vld [vmem:[#allocation5 + $0x3e8] sm:$0xff]
    %v1149 = vld [vmem:[#allocation5 + $0x3f0] sm:$0xff]
    %v1150 = vld [vmem:[#allocation5 + $0x3f8] sm:$0xff]
    %v1151 = vld [vmem:[#allocation5 + $0x400] sm:$0xff]
    %v1152 = vld [vmem:[#allocation5 + $0x408] sm:$0xff]
    %v1153 = vld [vmem:[#allocation5 + $0x410] sm:$0xff]
    %v1154 = vld [vmem:[#allocation5 + $0x418] sm:$0xff]
    %v1155 = vld [vmem:[#allocation5 + $0x420] sm:$0xff]
    %v1156 = vld [vmem:[#allocation5 + $0x428] sm:$0xff]
    %v1157 = vld [vmem:[#allocation5 + $0x430] sm:$0xff]
    %v1158 = vld [vmem:[#allocation5 + $0x438] sm:$0xff]
    %v1159 = vld [vmem:[#allocation5 + $0x440] sm:$0xff]
    %v1160 = vld [vmem:[#allocation5 + $0x448] sm:$0xff]
    %v1161 = vld [vmem:[#allocation5 + $0x450] sm:$0xff]
    %v1162 = vld [vmem:[#allocation5 + $0x458] sm:$0xff]
    %v1163 = vld [vmem:[#allocation5 + $0x460] sm:$0xff]
    %v1164 = vld [vmem:[#allocation5 + $0x468] sm:$0xff]
    %v1165 = vld [vmem:[#allocation5 + $0x470] sm:$0xff]
    %v1166 = vld [vmem:[#allocation5 + $0x478] sm:$0xff]
    %v1167 = vld [vmem:[#allocation5 + $0x480] sm:$0xff]
    %v1168 = vld [vmem:[#allocation5 + $0x488] sm:$0xff]
    %v1169 = vld [vmem:[#allocation5 + $0x490] sm:$0xff]
    %v1170 = vld [vmem:[#allocation5 + $0x498] sm:$0xff]
    %v1171 = vld [vmem:[#allocation5 + $0x4a0] sm:$0xff]
    %v1172 = vld [vmem:[#allocation5 + $0x4a8] sm:$0xff]
    %v1173 = vld [vmem:[#allocation5 + $0x4b0] sm:$0xff]
    %v1174 = vld [vmem:[#allocation5 + $0x4b8] sm:$0xff]
    %v1175 = vld [vmem:[#allocation5 + $0x4c0] sm:$0xff]
    %v1176 = vld [vmem:[#allocation5 + $0x4c8] sm:$0xff]
    %v1177 = vld [vmem:[#allocation5 + $0x4d0] sm:$0xff]
    %v1178 = vld [vmem:[#allocation5 + $0x4d8] sm:$0xff]
    %v1179 = vld [vmem:[#allocation5 + $0x4e0] sm:$0xff]
    %v1180 = vld [vmem:[#allocation5 + $0x4e8] sm:$0xff]
    %v1181 = vld [vmem:[#allocation5 + $0x4f0] sm:$0xff]
    %v1182 = vld [vmem:[#allocation5 + $0x4f8] sm:$0xff]
    %v1183 = vld [vmem:[%s2] sm:$0x3]
    %v1185 = vlaneseq
    %v1186 = vshrl.u32 %v1185, 7
    %v1187 = vsub.s32 0, %v1186
    %v1188 = vrot.slane %v1183, %v1187
    %v1189 = vlaneseq
    %v1190 = vshrl.u32 %v1189, 7
    %v1191 = vsub.s32 1, %v1190
    %v1192 = vrot.slane %v1183, %v1191
    %v1275 = vunpack.c.l.b16 %v943
    %v1276 = vunpack.c.l.b16 %v944
    %v1277 = vunpack.c.l.b16 %v945
    %v1278 = vunpack.c.l.b16 %v946
    %v1279 = vunpack.c.l.b16 %v947
    %v1280 = vunpack.c.l.b16 %v948
    %v1281 = vunpack.c.l.b16 %v949
    %v1282 = vunpack.c.l.b16 %v950
    %v1283 = vunpack.c.l.b16 %v951
    %v1284 = vunpack.c.l.b16 %v952
    %v1285 = vunpack.c.l.b16 %v953
    %v1286 = vunpack.c.l.b16 %v954
    %v1287 = vunpack.c.l.b16 %v955
    %v1288 = vunpack.c.l.b16 %v956
    %v1289 = vunpack.c.l.b16 %v957
    %v1290 = vunpack.c.l.b16 %v958
    %v1291 = vunpack.c.l.b16 %v959
    %v1292 = vunpack.c.l.b16 %v960
    %v1293 = vunpack.c.l.b16 %v961
    %v1294 = vunpack.c.l.b16 %v962
    %v1295 = vunpack.c.l.b16 %v963
    %v1296 = vunpack.c.l.b16 %v964
    %v1297 = vunpack.c.l.b16 %v965
    %v1298 = vunpack.c.l.b16 %v966
    %v1299 = vunpack.c.l.b16 %v967
    %v1300 = vunpack.c.l.b16 %v968
    %v1301 = vunpack.c.l.b16 %v969
    %v1302 = vunpack.c.l.b16 %v970
    %v1303 = vunpack.c.l.b16 %v971
    %v1304 = vunpack.c.l.b16 %v972
    %v1305 = vunpack.c.l.b16 %v973
    %v1306 = vunpack.c.l.b16 %v974
    %v1307 = vunpack.c.l.b16 %v975
    %v1308 = vunpack.c.l.b16 %v976
    %v1309 = vunpack.c.l.b16 %v977
    %v1310 = vunpack.c.l.b16 %v978
    %v1311 = vunpack.c.l.b16 %v979
    %v1312 = vunpack.c.l.b16 %v980
    %v1313 = vunpack.c.l.b16 %v981
    %v1314 = vunpack.c.l.b16 %v982
    %v1315 = vunpack.c.l.b16 %v983
    %v1316 = vunpack.c.l.b16 %v984
    %v1317 = vunpack.c.l.b16 %v985
    %v1318 = vunpack.c.l.b16 %v986
    %v1319 = vunpack.c.l.b16 %v987
    %v1320 = vunpack.c.l.b16 %v988
    %v1321 = vunpack.c.l.b16 %v989
    %v1322 = vunpack.c.l.b16 %v990
    %v1323 = vunpack.c.l.b16 %v991
    %v1324 = vunpack.c.l.b16 %v992
    %v1325 = vunpack.c.l.b16 %v993
    %v1326 = vunpack.c.l.b16 %v994
    %v1327 = vunpack.c.l.b16 %v995
    %v1328 = vunpack.c.l.b16 %v996
    %v1329 = vunpack.c.l.b16 %v997
    %v1330 = vunpack.c.l.b16 %v998
    %v1331 = vunpack.c.l.b16 %v999
    %v1332 = vunpack.c.l.b16 %v1000
    %v1333 = vunpack.c.l.b16 %v1001
    %v1334 = vunpack.c.l.b16 %v1002
    %v1335 = vunpack.c.l.b16 %v1003
    %v1336 = vunpack.c.l.b16 %v1004
    %v1337 = vunpack.c.l.b16 %v1005
    %v1338 = vunpack.c.l.b16 %v1006
    %v1339 = vunpack.c.l.b16 %v1007
    %v1340 = vunpack.c.l.b16 %v1008
    %v1341 = vunpack.c.l.b16 %v1009
    %v1342 = vunpack.c.l.b16 %v1010
    %v1343 = vunpack.c.l.b16 %v1011
    %v1344 = vunpack.c.l.b16 %v1012
    %v1345 = vunpack.c.l.b16 %v1013
    %v1346 = vunpack.c.l.b16 %v1014
    %v1347 = vunpack.c.l.b16 %v1015
    %v1348 = vunpack.c.l.b16 %v1016
    %v1349 = vunpack.c.l.b16 %v1017
    %v1350 = vunpack.c.l.b16 %v1018
    %v1351 = vunpack.c.l.b16 %v1019
    %v1352 = vunpack.c.l.b16 %v1020
    %v1353 = vunpack.c.l.b16 %v1021
    %v1354 = vunpack.c.l.b16 %v1022
    %vm1355 = vcmask 1041409
    %v1356 = vsel %vm1355, %v1285, %v1275
    %vm1357 = vcmask 1042434
    %v1358 = vsel %vm1357, %v1295, %v1356
    %vm1359 = vcmask 1043459
    %v1360 = vsel %vm1359, %v1305, %v1358
    %vm1361 = vcmask 1044484
    %v1362 = vsel %vm1361, %v1315, %v1360
    %vm1363 = vcmask 1045509
    %v1364 = vsel %vm1363, %v1325, %v1362
    %vm1365 = vcmask 1046534
    %v1366 = vsel %vm1365, %v1335, %v1364
    %vm1367 = vcmask 1047559
    %v1368 = vsel %vm1367, %v1345, %v1366
    %v1369 = vsel %vm1355, %v1286, %v1276
    %v1370 = vsel %vm1357, %v1296, %v1369
    %v1371 = vsel %vm1359, %v1306, %v1370
    %v1372 = vsel %vm1361, %v1316, %v1371
    %v1373 = vsel %vm1363, %v1326, %v1372
    %v1374 = vsel %vm1365, %v1336, %v1373
    %v1375 = vsel %vm1367, %v1346, %v1374
    %v1376 = vsel %vm1355, %v1287, %v1277
    %v1377 = vsel %vm1357, %v1297, %v1376
    %v1378 = vsel %vm1359, %v1307, %v1377
    %v1379 = vsel %vm1361, %v1317, %v1378
    %v1380 = vsel %vm1363, %v1327, %v1379
    %v1381 = vsel %vm1365, %v1337, %v1380
    %v1382 = vsel %vm1367, %v1347, %v1381
    %v1383 = vsel %vm1355, %v1288, %v1278
    %v1384 = vsel %vm1357, %v1298, %v1383
    %v1385 = vsel %vm1359, %v1308, %v1384
    %v1386 = vsel %vm1361, %v1318, %v1385
    %v1387 = vsel %vm1363, %v1328, %v1386
    %v1388 = vsel %vm1365, %v1338, %v1387
    %v1389 = vsel %vm1367, %v1348, %v1388
    %v1390 = vsel %vm1355, %v1289, %v1279
    %v1391 = vsel %vm1357, %v1299, %v1390
    %v1392 = vsel %vm1359, %v1309, %v1391
    %v1393 = vsel %vm1361, %v1319, %v1392
    %v1394 = vsel %vm1363, %v1329, %v1393
    %v1395 = vsel %vm1365, %v1339, %v1394
    %v1396 = vsel %vm1367, %v1349, %v1395
    %v1397 = vsel %vm1355, %v1290, %v1280
    %v1398 = vsel %vm1357, %v1300, %v1397
    %v1399 = vsel %vm1359, %v1310, %v1398
    %v1400 = vsel %vm1361, %v1320, %v1399
    %v1401 = vsel %vm1363, %v1330, %v1400
    %v1402 = vsel %vm1365, %v1340, %v1401
    %v1403 = vsel %vm1367, %v1350, %v1402
    %v1404 = vsel %vm1355, %v1291, %v1281
    %v1405 = vsel %vm1357, %v1301, %v1404
    %v1406 = vsel %vm1359, %v1311, %v1405
    %v1407 = vsel %vm1361, %v1321, %v1406
    %v1408 = vsel %vm1363, %v1331, %v1407
    %v1409 = vsel %vm1365, %v1341, %v1408
    %v1410 = vsel %vm1367, %v1351, %v1409
    %v1411 = vsel %vm1355, %v1292, %v1282
    %v1412 = vsel %vm1357, %v1302, %v1411
    %v1413 = vsel %vm1359, %v1312, %v1412
    %v1414 = vsel %vm1361, %v1322, %v1413
    %v1415 = vsel %vm1363, %v1332, %v1414
    %v1416 = vsel %vm1365, %v1342, %v1415
    %v1417 = vsel %vm1367, %v1352, %v1416
    %v1418 = vsel %vm1355, %v1293, %v1283
    %v1419 = vsel %vm1357, %v1303, %v1418
    %v1420 = vsel %vm1359, %v1313, %v1419
    %v1421 = vsel %vm1361, %v1323, %v1420
    %v1422 = vsel %vm1363, %v1333, %v1421
    %v1423 = vsel %vm1365, %v1343, %v1422
    %v1424 = vsel %vm1367, %v1353, %v1423
    %v1425 = vsel %vm1355, %v1294, %v1284
    %v1426 = vsel %vm1357, %v1304, %v1425
    %v1427 = vsel %vm1359, %v1314, %v1426
    %v1428 = vsel %vm1361, %v1324, %v1427
    %v1429 = vsel %vm1363, %v1334, %v1428
    %v1430 = vsel %vm1365, %v1344, %v1429
    %v1431 = vsel %vm1367, %v1354, %v1430
    %v1432 = vpack.c.b16 %v1368, %v1368
    %v1433 = vpack.c.b16 %v1375, %v1375
    %v1434 = vpack.c.b16 %v1382, %v1382
    %v1435 = vpack.c.b16 %v1389, %v1389
    %v1436 = vpack.c.b16 %v1396, %v1396
    %v1437 = vpack.c.b16 %v1403, %v1403
    %v1438 = vpack.c.b16 %v1410, %v1410
    %v1439 = vpack.c.b16 %v1417, %v1417
    %v1440 = vpack.c.b16 %v1424, %v1424
    %v1441 = vpack.c.b16 %v1431, %v1431
    %v1612 = vunpack.c.l.b16 %v1023
    %v1613 = vunpack.c.h.b16 %v1023
    %v1614 = vunpack.c.l.b16 %v1024
    %v1615 = vunpack.c.h.b16 %v1024
    %v1616 = vunpack.c.l.b16 %v1025
    %v1617 = vunpack.c.h.b16 %v1025
    %v1618 = vunpack.c.l.b16 %v1026
    %v1619 = vunpack.c.h.b16 %v1026
    %v1620 = vunpack.c.l.b16 %v1027
    %v1621 = vunpack.c.h.b16 %v1027
    %v1622 = vunpack.c.l.b16 %v1028
    %v1623 = vunpack.c.h.b16 %v1028
    %v1624 = vunpack.c.l.b16 %v1029
    %v1625 = vunpack.c.h.b16 %v1029
    %v1626 = vunpack.c.l.b16 %v1030
    %v1627 = vunpack.c.h.b16 %v1030
    %v1628 = vunpack.c.l.b16 %v1031
    %v1629 = vunpack.c.h.b16 %v1031
    %v1630 = vunpack.c.l.b16 %v1032
    %v1631 = vunpack.c.h.b16 %v1032
    %v1632 = vunpack.c.l.b16 %v1033
    %v1633 = vunpack.c.h.b16 %v1033
    %v1634 = vunpack.c.l.b16 %v1034
    %v1635 = vunpack.c.h.b16 %v1034
    %v1636 = vunpack.c.l.b16 %v1035
    %v1637 = vunpack.c.h.b16 %v1035
    %v1638 = vunpack.c.l.b16 %v1036
    %v1639 = vunpack.c.h.b16 %v1036
    %v1640 = vunpack.c.l.b16 %v1037
    %v1641 = vunpack.c.h.b16 %v1037
    %v1642 = vunpack.c.l.b16 %v1038
    %v1643 = vunpack.c.h.b16 %v1038
    %v1644 = vunpack.c.l.b16 %v1039
    %v1645 = vunpack.c.h.b16 %v1039
    %v1646 = vunpack.c.l.b16 %v1040
    %v1647 = vunpack.c.h.b16 %v1040
    %v1648 = vunpack.c.l.b16 %v1041
    %v1649 = vunpack.c.h.b16 %v1041
    %v1650 = vunpack.c.l.b16 %v1042
    %v1651 = vunpack.c.h.b16 %v1042
    %v1652 = vunpack.c.l.b16 %v1043
    %v1653 = vunpack.c.h.b16 %v1043
    %v1654 = vunpack.c.l.b16 %v1044
    %v1655 = vunpack.c.h.b16 %v1044
    %v1656 = vunpack.c.l.b16 %v1045
    %v1657 = vunpack.c.h.b16 %v1045
    %v1658 = vunpack.c.l.b16 %v1046
    %v1659 = vunpack.c.h.b16 %v1046
    %v1660 = vunpack.c.l.b16 %v1047
    %v1661 = vunpack.c.h.b16 %v1047
    %v1662 = vunpack.c.l.b16 %v1048
    %v1663 = vunpack.c.h.b16 %v1048
    %v1664 = vunpack.c.l.b16 %v1049
    %v1665 = vunpack.c.h.b16 %v1049
    %v1666 = vunpack.c.l.b16 %v1050
    %v1667 = vunpack.c.h.b16 %v1050
    %v1668 = vunpack.c.l.b16 %v1051
    %v1669 = vunpack.c.h.b16 %v1051
    %v1670 = vunpack.c.l.b16 %v1052
    %v1671 = vunpack.c.h.b16 %v1052
    %v1672 = vunpack.c.l.b16 %v1053
    %v1673 = vunpack.c.h.b16 %v1053
    %v1674 = vunpack.c.l.b16 %v1054
    %v1675 = vunpack.c.h.b16 %v1054
    %v1676 = vunpack.c.l.b16 %v1055
    %v1677 = vunpack.c.h.b16 %v1055
    %v1678 = vunpack.c.l.b16 %v1056
    %v1679 = vunpack.c.h.b16 %v1056
    %v1680 = vunpack.c.l.b16 %v1057
    %v1681 = vunpack.c.h.b16 %v1057
    %v1682 = vunpack.c.l.b16 %v1058
    %v1683 = vunpack.c.h.b16 %v1058
    %v1684 = vunpack.c.l.b16 %v1059
    %v1685 = vunpack.c.h.b16 %v1059
    %v1686 = vunpack.c.l.b16 %v1060
    %v1687 = vunpack.c.h.b16 %v1060
    %v1688 = vunpack.c.l.b16 %v1061
    %v1689 = vunpack.c.h.b16 %v1061
    %v1690 = vunpack.c.l.b16 %v1062
    %v1691 = vunpack.c.h.b16 %v1062
    %v1692 = vunpack.c.l.b16 %v1063
    %v1693 = vunpack.c.h.b16 %v1063
    %v1694 = vunpack.c.l.b16 %v1064
    %v1695 = vunpack.c.h.b16 %v1064
    %v1696 = vunpack.c.l.b16 %v1065
    %v1697 = vunpack.c.h.b16 %v1065
    %v1698 = vunpack.c.l.b16 %v1066
    %v1699 = vunpack.c.h.b16 %v1066
    %v1700 = vunpack.c.l.b16 %v1067
    %v1701 = vunpack.c.h.b16 %v1067
    %v1702 = vunpack.c.l.b16 %v1068
    %v1703 = vunpack.c.h.b16 %v1068
    %v1704 = vunpack.c.l.b16 %v1069
    %v1705 = vunpack.c.h.b16 %v1069
    %v1706 = vunpack.c.l.b16 %v1070
    %v1707 = vunpack.c.h.b16 %v1070
    %v1708 = vunpack.c.l.b16 %v1071
    %v1709 = vunpack.c.h.b16 %v1071
    %v1710 = vunpack.c.l.b16 %v1072
    %v1711 = vunpack.c.h.b16 %v1072
    %v1712 = vunpack.c.l.b16 %v1073
    %v1713 = vunpack.c.h.b16 %v1073
    %v1714 = vunpack.c.l.b16 %v1074
    %v1715 = vunpack.c.h.b16 %v1074
    %v1716 = vunpack.c.l.b16 %v1075
    %v1717 = vunpack.c.h.b16 %v1075
    %v1718 = vunpack.c.l.b16 %v1076
    %v1719 = vunpack.c.h.b16 %v1076
    %v1720 = vunpack.c.l.b16 %v1077
    %v1721 = vunpack.c.h.b16 %v1077
    %v1722 = vunpack.c.l.b16 %v1078
    %v1723 = vunpack.c.h.b16 %v1078
    %v1724 = vunpack.c.l.b16 %v1079
    %v1725 = vunpack.c.h.b16 %v1079
    %v1726 = vunpack.c.l.b16 %v1080
    %v1727 = vunpack.c.h.b16 %v1080
    %v1728 = vunpack.c.l.b16 %v1081
    %v1729 = vunpack.c.h.b16 %v1081
    %v1730 = vunpack.c.l.b16 %v1082
    %v1731 = vunpack.c.h.b16 %v1082
    %v1732 = vunpack.c.l.b16 %v1083
    %v1733 = vunpack.c.h.b16 %v1083
    %v1734 = vunpack.c.l.b16 %v1084
    %v1735 = vunpack.c.h.b16 %v1084
    %v1736 = vunpack.c.l.b16 %v1085
    %v1737 = vunpack.c.h.b16 %v1085
    %v1738 = vunpack.c.l.b16 %v1086
    %v1739 = vunpack.c.h.b16 %v1086
    %v1740 = vunpack.c.l.b16 %v1087
    %v1741 = vunpack.c.h.b16 %v1087
    %v1742 = vunpack.c.l.b16 %v1088
    %v1743 = vunpack.c.h.b16 %v1088
    %v1744 = vunpack.c.l.b16 %v1089
    %v1745 = vunpack.c.h.b16 %v1089
    %v1746 = vunpack.c.l.b16 %v1090
    %v1747 = vunpack.c.h.b16 %v1090
    %v1748 = vunpack.c.l.b16 %v1091
    %v1749 = vunpack.c.h.b16 %v1091
    %v1750 = vunpack.c.l.b16 %v1092
    %v1751 = vunpack.c.h.b16 %v1092
    %v1752 = vunpack.c.l.b16 %v1093
    %v1753 = vunpack.c.h.b16 %v1093
    %v1754 = vunpack.c.l.b16 %v1094
    %v1755 = vunpack.c.h.b16 %v1094
    %v1756 = vunpack.c.l.b16 %v1095
    %v1757 = vunpack.c.h.b16 %v1095
    %v1758 = vunpack.c.l.b16 %v1096
    %v1759 = vunpack.c.h.b16 %v1096
    %v1760 = vunpack.c.l.b16 %v1097
    %v1761 = vunpack.c.h.b16 %v1097
    %v1762 = vunpack.c.l.b16 %v1098
    %v1763 = vunpack.c.h.b16 %v1098
    %v1764 = vunpack.c.l.b16 %v1099
    %v1765 = vunpack.c.h.b16 %v1099
    %v1766 = vunpack.c.l.b16 %v1100
    %v1767 = vunpack.c.h.b16 %v1100
    %v1768 = vunpack.c.l.b16 %v1101
    %v1769 = vunpack.c.h.b16 %v1101
    %v1770 = vunpack.c.l.b16 %v1102
    %v1771 = vunpack.c.h.b16 %v1102
    %v1772 = vunpack.c.l.b16 %v1103
    %v1773 = vunpack.c.h.b16 %v1103
    %v1774 = vunpack.c.l.b16 %v1104
    %v1775 = vunpack.c.h.b16 %v1104
    %v1776 = vunpack.c.l.b16 %v1105
    %v1777 = vunpack.c.h.b16 %v1105
    %v1778 = vunpack.c.l.b16 %v1106
    %v1779 = vunpack.c.h.b16 %v1106
    %v1780 = vunpack.c.l.b16 %v1107
    %v1781 = vunpack.c.h.b16 %v1107
    %v1782 = vunpack.c.l.b16 %v1108
    %v1783 = vunpack.c.h.b16 %v1108
    %v1784 = vunpack.c.l.b16 %v1109
    %v1785 = vunpack.c.h.b16 %v1109
    %v1786 = vunpack.c.l.b16 %v1110
    %v1787 = vunpack.c.h.b16 %v1110
    %v1788 = vunpack.c.l.b16 %v1111
    %v1789 = vunpack.c.h.b16 %v1111
    %v1790 = vunpack.c.l.b16 %v1112
    %v1791 = vunpack.c.h.b16 %v1112
    %v1792 = vunpack.c.l.b16 %v1113
    %v1793 = vunpack.c.h.b16 %v1113
    %v1794 = vunpack.c.l.b16 %v1114
    %v1795 = vunpack.c.h.b16 %v1114
    %v1796 = vunpack.c.l.b16 %v1115
    %v1797 = vunpack.c.h.b16 %v1115
    %v1798 = vunpack.c.l.b16 %v1116
    %v1799 = vunpack.c.h.b16 %v1116
    %v1800 = vunpack.c.l.b16 %v1117
    %v1801 = vunpack.c.h.b16 %v1117
    %v1802 = vunpack.c.l.b16 %v1118
    %v1803 = vunpack.c.h.b16 %v1118
    %v1804 = vunpack.c.l.b16 %v1119
    %v1805 = vunpack.c.h.b16 %v1119
    %v1806 = vunpack.c.l.b16 %v1120
    %v1807 = vunpack.c.h.b16 %v1120
    %v1808 = vunpack.c.l.b16 %v1121
    %v1809 = vunpack.c.h.b16 %v1121
    %v1810 = vunpack.c.l.b16 %v1122
    %v1811 = vunpack.c.h.b16 %v1122
    %v1812 = vunpack.c.l.b16 %v1123
    %v1813 = vunpack.c.h.b16 %v1123
    %v1814 = vunpack.c.l.b16 %v1124
    %v1815 = vunpack.c.h.b16 %v1124
    %v1816 = vunpack.c.l.b16 %v1125
    %v1817 = vunpack.c.h.b16 %v1125
    %v1818 = vunpack.c.l.b16 %v1126
    %v1819 = vunpack.c.h.b16 %v1126
    %v1820 = vunpack.c.l.b16 %v1127
    %v1821 = vunpack.c.h.b16 %v1127
    %v1822 = vunpack.c.l.b16 %v1128
    %v1823 = vunpack.c.h.b16 %v1128
    %v1824 = vunpack.c.l.b16 %v1129
    %v1825 = vunpack.c.h.b16 %v1129
    %v1826 = vunpack.c.l.b16 %v1130
    %v1827 = vunpack.c.h.b16 %v1130
    %v1828 = vunpack.c.l.b16 %v1131
    %v1829 = vunpack.c.h.b16 %v1131
    %v1830 = vunpack.c.l.b16 %v1132
    %v1831 = vunpack.c.h.b16 %v1132
    %v1832 = vunpack.c.l.b16 %v1133
    %v1833 = vunpack.c.h.b16 %v1133
    %v1834 = vunpack.c.l.b16 %v1134
    %v1835 = vunpack.c.h.b16 %v1134
    %v1836 = vunpack.c.l.b16 %v1135
    %v1837 = vunpack.c.h.b16 %v1135
    %v1838 = vunpack.c.l.b16 %v1136
    %v1839 = vunpack.c.h.b16 %v1136
    %v1840 = vunpack.c.l.b16 %v1137
    %v1841 = vunpack.c.h.b16 %v1137
    %v1842 = vunpack.c.l.b16 %v1138
    %v1843 = vunpack.c.h.b16 %v1138
    %v1844 = vunpack.c.l.b16 %v1139
    %v1845 = vunpack.c.h.b16 %v1139
    %v1846 = vunpack.c.l.b16 %v1140
    %v1847 = vunpack.c.h.b16 %v1140
    %v1848 = vunpack.c.l.b16 %v1141
    %v1849 = vunpack.c.h.b16 %v1141
    %v1850 = vunpack.c.l.b16 %v1142
    %v1851 = vunpack.c.h.b16 %v1142
    %v1852 = vunpack.c.l.b16 %v1143
    %v1853 = vunpack.c.h.b16 %v1143
    %v1854 = vunpack.c.l.b16 %v1144
    %v1855 = vunpack.c.h.b16 %v1144
    %v1856 = vunpack.c.l.b16 %v1145
    %v1857 = vunpack.c.h.b16 %v1145
    %v1858 = vunpack.c.l.b16 %v1146
    %v1859 = vunpack.c.h.b16 %v1146
    %v1860 = vunpack.c.l.b16 %v1147
    %v1861 = vunpack.c.h.b16 %v1147
    %v1862 = vunpack.c.l.b16 %v1148
    %v1863 = vunpack.c.h.b16 %v1148
    %v1864 = vunpack.c.l.b16 %v1149
    %v1865 = vunpack.c.h.b16 %v1149
    %v1866 = vunpack.c.l.b16 %v1150
    %v1867 = vunpack.c.h.b16 %v1150
    %v1868 = vunpack.c.l.b16 %v1151
    %v1869 = vunpack.c.h.b16 %v1151
    %v1870 = vunpack.c.l.b16 %v1152
    %v1871 = vunpack.c.h.b16 %v1152
    %v1872 = vunpack.c.l.b16 %v1153
    %v1873 = vunpack.c.h.b16 %v1153
    %v1874 = vunpack.c.l.b16 %v1154
    %v1875 = vunpack.c.h.b16 %v1154
    %v1876 = vunpack.c.l.b16 %v1155
    %v1877 = vunpack.c.h.b16 %v1155
    %v1878 = vunpack.c.l.b16 %v1156
    %v1879 = vunpack.c.h.b16 %v1156
    %v1880 = vunpack.c.l.b16 %v1157
    %v1881 = vunpack.c.h.b16 %v1157
    %v1882 = vunpack.c.l.b16 %v1158
    %v1883 = vunpack.c.h.b16 %v1158
    %v1884 = vunpack.c.l.b16 %v1159
    %v1885 = vunpack.c.h.b16 %v1159
    %v1886 = vunpack.c.l.b16 %v1160
    %v1887 = vunpack.c.h.b16 %v1160
    %v1888 = vunpack.c.l.b16 %v1161
    %v1889 = vunpack.c.h.b16 %v1161
    %v1890 = vunpack.c.l.b16 %v1162
    %v1891 = vunpack.c.h.b16 %v1162
    %v1892 = vunpack.c.l.b16 %v1163
    %v1893 = vunpack.c.h.b16 %v1163
    %v1894 = vunpack.c.l.b16 %v1164
    %v1895 = vunpack.c.h.b16 %v1164
    %v1896 = vunpack.c.l.b16 %v1165
    %v1897 = vunpack.c.h.b16 %v1165
    %v1898 = vunpack.c.l.b16 %v1166
    %v1899 = vunpack.c.h.b16 %v1166
    %v1900 = vunpack.c.l.b16 %v1167
    %v1901 = vunpack.c.h.b16 %v1167
    %v1902 = vunpack.c.l.b16 %v1168
    %v1903 = vunpack.c.h.b16 %v1168
    %v1904 = vunpack.c.l.b16 %v1169
    %v1905 = vunpack.c.h.b16 %v1169
    %v1906 = vunpack.c.l.b16 %v1170
    %v1907 = vunpack.c.h.b16 %v1170
    %v1908 = vunpack.c.l.b16 %v1171
    %v1909 = vunpack.c.h.b16 %v1171
    %v1910 = vunpack.c.l.b16 %v1172
    %v1911 = vunpack.c.h.b16 %v1172
    %v1912 = vunpack.c.l.b16 %v1173
    %v1913 = vunpack.c.h.b16 %v1173
    %v1914 = vunpack.c.l.b16 %v1174
    %v1915 = vunpack.c.h.b16 %v1174
    %v1916 = vunpack.c.l.b16 %v1175
    %v1917 = vunpack.c.h.b16 %v1175
    %v1918 = vunpack.c.l.b16 %v1176
    %v1919 = vunpack.c.h.b16 %v1176
    %v1920 = vunpack.c.l.b16 %v1177
    %v1921 = vunpack.c.h.b16 %v1177
    %v1922 = vunpack.c.l.b16 %v1178
    %v1923 = vunpack.c.h.b16 %v1178
    %v1924 = vunpack.c.l.b16 %v1179
    %v1925 = vunpack.c.h.b16 %v1179
    %v1926 = vunpack.c.l.b16 %v1180
    %v1927 = vunpack.c.h.b16 %v1180
    %v1928 = vunpack.c.l.b16 %v1181
    %v1929 = vunpack.c.h.b16 %v1181
    %v1930 = vunpack.c.l.b16 %v1182
    %v1931 = vunpack.c.h.b16 %v1182
    %v1932 = vpack.c.b16 %v1614, %v1612
    %v1933 = vpack.c.b16 %v1615, %v1613
    %v1934 = vpack.c.b16 %v1618, %v1616
    %v1935 = vpack.c.b16 %v1619, %v1617
    %v1936 = vpack.c.b16 %v1622, %v1620
    %v1937 = vpack.c.b16 %v1623, %v1621
    %v1938 = vpack.c.b16 %v1626, %v1624
    %v1939 = vpack.c.b16 %v1627, %v1625
    %v1940 = vpack.c.b16 %v1630, %v1628
    %v1941 = vpack.c.b16 %v1631, %v1629
    %v1942 = vpack.c.b16 %v1634, %v1632
    %v1943 = vpack.c.b16 %v1635, %v1633
    %v1944 = vpack.c.b16 %v1638, %v1636
    %v1945 = vpack.c.b16 %v1639, %v1637
    %v1946 = vpack.c.b16 %v1642, %v1640
    %v1947 = vpack.c.b16 %v1643, %v1641
    %v1948 = vpack.c.b16 %v1646, %v1644
    %v1949 = vpack.c.b16 %v1647, %v1645
    %v1950 = vpack.c.b16 %v1650, %v1648
    %v1951 = vpack.c.b16 %v1651, %v1649
    %v1952 = vpack.c.b16 %v1654, %v1652
    %v1953 = vpack.c.b16 %v1655, %v1653
    %v1954 = vpack.c.b16 %v1658, %v1656
    %v1955 = vpack.c.b16 %v1659, %v1657
    %v1956 = vpack.c.b16 %v1662, %v1660
    %v1957 = vpack.c.b16 %v1663, %v1661
    %v1958 = vpack.c.b16 %v1666, %v1664
    %v1959 = vpack.c.b16 %v1667, %v1665
    %v1960 = vpack.c.b16 %v1670, %v1668
    %v1961 = vpack.c.b16 %v1671, %v1669
    %v1962 = vpack.c.b16 %v1674, %v1672
    %v1963 = vpack.c.b16 %v1675, %v1673
    %v1964 = vpack.c.b16 %v1678, %v1676
    %v1965 = vpack.c.b16 %v1679, %v1677
    %v1966 = vpack.c.b16 %v1682, %v1680
    %v1967 = vpack.c.b16 %v1683, %v1681
    %v1968 = vpack.c.b16 %v1686, %v1684
    %v1969 = vpack.c.b16 %v1687, %v1685
    %v1970 = vpack.c.b16 %v1690, %v1688
    %v1971 = vpack.c.b16 %v1691, %v1689
    %v1972 = vpack.c.b16 %v1694, %v1692
    %v1973 = vpack.c.b16 %v1695, %v1693
    %v1974 = vpack.c.b16 %v1698, %v1696
    %v1975 = vpack.c.b16 %v1699, %v1697
    %v1976 = vpack.c.b16 %v1702, %v1700
    %v1977 = vpack.c.b16 %v1703, %v1701
    %v1978 = vpack.c.b16 %v1706, %v1704
    %v1979 = vpack.c.b16 %v1707, %v1705
    %v1980 = vpack.c.b16 %v1710, %v1708
    %v1981 = vpack.c.b16 %v1711, %v1709
    %v1982 = vpack.c.b16 %v1714, %v1712
    %v1983 = vpack.c.b16 %v1715, %v1713
    %v1984 = vpack.c.b16 %v1718, %v1716
    %v1985 = vpack.c.b16 %v1719, %v1717
    %v1986 = vpack.c.b16 %v1722, %v1720
    %v1987 = vpack.c.b16 %v1723, %v1721
    %v1988 = vpack.c.b16 %v1726, %v1724
    %v1989 = vpack.c.b16 %v1727, %v1725
    %v1990 = vpack.c.b16 %v1730, %v1728
    %v1991 = vpack.c.b16 %v1731, %v1729
    %v1992 = vpack.c.b16 %v1734, %v1732
    %v1993 = vpack.c.b16 %v1735, %v1733
    %v1994 = vpack.c.b16 %v1738, %v1736
    %v1995 = vpack.c.b16 %v1739, %v1737
    %v1996 = vpack.c.b16 %v1742, %v1740
    %v1997 = vpack.c.b16 %v1743, %v1741
    %v1998 = vpack.c.b16 %v1746, %v1744
    %v1999 = vpack.c.b16 %v1747, %v1745
    %v2000 = vpack.c.b16 %v1750, %v1748
    %v2001 = vpack.c.b16 %v1751, %v1749
    %v2002 = vpack.c.b16 %v1754, %v1752
    %v2003 = vpack.c.b16 %v1755, %v1753
    %v2004 = vpack.c.b16 %v1758, %v1756
    %v2005 = vpack.c.b16 %v1759, %v1757
    %v2006 = vpack.c.b16 %v1762, %v1760
    %v2007 = vpack.c.b16 %v1763, %v1761
    %v2008 = vpack.c.b16 %v1766, %v1764
    %v2009 = vpack.c.b16 %v1767, %v1765
    %v2010 = vpack.c.b16 %v1770, %v1768
    %v2011 = vpack.c.b16 %v1771, %v1769
    %v2012 = vpack.c.b16 %v1774, %v1772
    %v2013 = vpack.c.b16 %v1775, %v1773
    %v2014 = vpack.c.b16 %v1778, %v1776
    %v2015 = vpack.c.b16 %v1779, %v1777
    %v2016 = vpack.c.b16 %v1782, %v1780
    %v2017 = vpack.c.b16 %v1783, %v1781
    %v2018 = vpack.c.b16 %v1786, %v1784
    %v2019 = vpack.c.b16 %v1787, %v1785
    %v2020 = vpack.c.b16 %v1790, %v1788
    %v2021 = vpack.c.b16 %v1791, %v1789
    %v2022 = vpack.c.b16 %v1794, %v1792
    %v2023 = vpack.c.b16 %v1795, %v1793
    %v2024 = vpack.c.b16 %v1798, %v1796
    %v2025 = vpack.c.b16 %v1799, %v1797
    %v2026 = vpack.c.b16 %v1802, %v1800
    %v2027 = vpack.c.b16 %v1803, %v1801
    %v2028 = vpack.c.b16 %v1806, %v1804
    %v2029 = vpack.c.b16 %v1807, %v1805
    %v2030 = vpack.c.b16 %v1810, %v1808
    %v2031 = vpack.c.b16 %v1811, %v1809
    %v2032 = vpack.c.b16 %v1814, %v1812
    %v2033 = vpack.c.b16 %v1815, %v1813
    %v2034 = vpack.c.b16 %v1818, %v1816
    %v2035 = vpack.c.b16 %v1819, %v1817
    %v2036 = vpack.c.b16 %v1822, %v1820
    %v2037 = vpack.c.b16 %v1823, %v1821
    %v2038 = vpack.c.b16 %v1826, %v1824
    %v2039 = vpack.c.b16 %v1827, %v1825
    %v2040 = vpack.c.b16 %v1830, %v1828
    %v2041 = vpack.c.b16 %v1831, %v1829
    %v2042 = vpack.c.b16 %v1834, %v1832
    %v2043 = vpack.c.b16 %v1835, %v1833
    %v2044 = vpack.c.b16 %v1838, %v1836
    %v2045 = vpack.c.b16 %v1839, %v1837
    %v2046 = vpack.c.b16 %v1842, %v1840
    %v2047 = vpack.c.b16 %v1843, %v1841
    %v2048 = vpack.c.b16 %v1846, %v1844
    %v2049 = vpack.c.b16 %v1847, %v1845
    %v2050 = vpack.c.b16 %v1850, %v1848
    %v2051 = vpack.c.b16 %v1851, %v1849
    %v2052 = vpack.c.b16 %v1854, %v1852
    %v2053 = vpack.c.b16 %v1855, %v1853
    %v2054 = vpack.c.b16 %v1858, %v1856
    %v2055 = vpack.c.b16 %v1859, %v1857
    %v2056 = vpack.c.b16 %v1862, %v1860
    %v2057 = vpack.c.b16 %v1863, %v1861
    %v2058 = vpack.c.b16 %v1866, %v1864
    %v2059 = vpack.c.b16 %v1867, %v1865
    %v2060 = vpack.c.b16 %v1870, %v1868
    %v2061 = vpack.c.b16 %v1871, %v1869
    %v2062 = vpack.c.b16 %v1874, %v1872
    %v2063 = vpack.c.b16 %v1875, %v1873
    %v2064 = vpack.c.b16 %v1878, %v1876
    %v2065 = vpack.c.b16 %v1879, %v1877
    %v2066 = vpack.c.b16 %v1882, %v1880
    %v2067 = vpack.c.b16 %v1883, %v1881
    %v2068 = vpack.c.b16 %v1886, %v1884
    %v2069 = vpack.c.b16 %v1887, %v1885
    %v2070 = vpack.c.b16 %v1890, %v1888
    %v2071 = vpack.c.b16 %v1891, %v1889
    %v2072 = vpack.c.b16 %v1894, %v1892
    %v2073 = vpack.c.b16 %v1895, %v1893
    %v2074 = vpack.c.b16 %v1898, %v1896
    %v2075 = vpack.c.b16 %v1899, %v1897
    %v2076 = vpack.c.b16 %v1902, %v1900
    %v2077 = vpack.c.b16 %v1903, %v1901
    %v2078 = vpack.c.b16 %v1906, %v1904
    %v2079 = vpack.c.b16 %v1907, %v1905
    %v2080 = vpack.c.b16 %v1910, %v1908
    %v2081 = vpack.c.b16 %v1911, %v1909
    %v2082 = vpack.c.b16 %v1914, %v1912
    %v2083 = vpack.c.b16 %v1915, %v1913
    %v2084 = vpack.c.b16 %v1918, %v1916
    %v2085 = vpack.c.b16 %v1919, %v1917
    %v2086 = vpack.c.b16 %v1922, %v1920
    %v2087 = vpack.c.b16 %v1923, %v1921
    %v2088 = vpack.c.b16 %v1926, %v1924
    %v2089 = vpack.c.b16 %v1927, %v1925
    %v2090 = vpack.c.b16 %v1930, %v1928
    %v2091 = vpack.c.b16 %v1931, %v1929
    %2252 = vmatprep.subr.bf16.mxu0 %v1947
    %2253 = vmatpush1.bf16.msra.mxu0 %v1946
    %2254 = vmatprep.subr.bf16.mxu0 %v1945
    %2255 = vmatpush1.bf16.msra.mxu0 %v1944
    %2256 = vmatprep.subr.bf16.mxu0 %v1943
    %2257 = vmatpush1.bf16.msra.mxu0 %v1942
    %2258 = vmatprep.subr.bf16.mxu0 %v1941
    %2259 = vmatpush1.bf16.msra.mxu0 %v1940
    %2260 = vmatprep.subr.bf16.mxu0 %v1939
    %2261 = vmatpush1.bf16.msra.mxu0 %v1938
    %2262 = vmatprep.subr.bf16.mxu0 %v1937
    %2263 = vmatpush1.bf16.msra.mxu0 %v1936
    %2264 = vmatprep.subr.bf16.mxu0 %v1935
    %2265 = vmatpush1.bf16.msra.mxu0 %v1934
    %2266 = vmatprep.subr.bf16.mxu0 %v1933
    %2267 = vmatpush1.bf16.msra.mxu0 %v1932
    %2268 = vmatprep.subr.bf16.mxu0 %v1963
    %2269 = vmatpush2.bf16.msra.mxu0 %v1962
    %2270 = vmatprep.subr.bf16.mxu0 %v1961
    %2271 = vmatpush2.bf16.msra.mxu0 %v1960
    %2272 = vmatprep.subr.bf16.mxu0 %v1959
    %2273 = vmatpush2.bf16.msra.mxu0 %v1958
    %2274 = vmatprep.subr.bf16.mxu0 %v1957
    %2275 = vmatpush2.bf16.msra.mxu0 %v1956
    %2276 = vmatprep.subr.bf16.mxu0 %v1955
    %2277 = vmatpush2.bf16.msra.mxu0 %v1954
    %2278 = vmatprep.subr.bf16.mxu0 %v1953
    %2279 = vmatpush2.bf16.msra.mxu0 %v1952
    %2280 = vmatprep.subr.bf16.mxu0 %v1951
    %2281 = vmatpush2.bf16.msra.mxu0 %v1950
    %2282 = vmatprep.subr.bf16.mxu0 %v1949
    %2283 = vmatpush2.bf16.msra.mxu0 %v1948
    %2284 = vmatprep.mubr.bf16.mxu0 %v1433
    %2285 = vmatmul.mubr.bf16.gmra.mxu0 %v1432
    %v2286 = vpop.f32.mrf.mxu0
    %v2287 = vadd.f32 %v1188, %v2286
    %v2288 = vpop.f32.mrf.mxu0
    %v2289 = vadd.f32 %v1192, %v2288
    %v2290 = vpop.f32.mrf.mxu0
    %v2291 = vpop.f32.mrf.mxu0
    %2292 = vdwg.mxu0
    %2293 = vmatprep.subr.bf16.mxu0 %v1979
    %2294 = vmatpush1.bf16.msra.mxu0 %v1978
    %2295 = vmatprep.subr.bf16.mxu0 %v1977
    %2296 = vmatpush1.bf16.msra.mxu0 %v1976
    %2297 = vmatprep.subr.bf16.mxu0 %v1975
    %2298 = vmatpush1.bf16.msra.mxu0 %v1974
    %2299 = vmatprep.subr.bf16.mxu0 %v1973
    %2300 = vmatpush1.bf16.msra.mxu0 %v1972
    %2301 = vmatprep.subr.bf16.mxu0 %v1971
    %2302 = vmatpush1.bf16.msra.mxu0 %v1970
    %2303 = vmatprep.subr.bf16.mxu0 %v1969
    %2304 = vmatpush1.bf16.msra.mxu0 %v1968
    %2305 = vmatprep.subr.bf16.mxu0 %v1967
    %2306 = vmatpush1.bf16.msra.mxu0 %v1966
    %2307 = vmatprep.subr.bf16.mxu0 %v1965
    %2308 = vmatpush1.bf16.msra.mxu0 %v1964
    %2309 = vmatprep.subr.bf16.mxu0 %v1995
    %2310 = vmatpush2.bf16.msra.mxu0 %v1994
    %2311 = vmatprep.subr.bf16.mxu0 %v1993
    %2312 = vmatpush2.bf16.msra.mxu0 %v1992
    %2313 = vmatprep.subr.bf16.mxu0 %v1991
    %2314 = vmatpush2.bf16.msra.mxu0 %v1990
    %2315 = vmatprep.subr.bf16.mxu0 %v1989
    %2316 = vmatpush2.bf16.msra.mxu0 %v1988
    %2317 = vmatprep.subr.bf16.mxu0 %v1987
    %2318 = vmatpush2.bf16.msra.mxu0 %v1986
    %2319 = vmatprep.subr.bf16.mxu0 %v1985
    %2320 = vmatpush2.bf16.msra.mxu0 %v1984
    %2321 = vmatprep.subr.bf16.mxu0 %v1983
    %2322 = vmatpush2.bf16.msra.mxu0 %v1982
    %2323 = vmatprep.subr.bf16.mxu0 %v1981
    %2324 = vmatpush2.bf16.msra.mxu0 %v1980
    %2325 = vmatprep.mubr.bf16.mxu0 %v1435
    %2326 = vmatmul.mubr.bf16.gmra.mxu0 %v1434
    %v2327 = vpop.f32.mrf.mxu0
    %v2328 = vadd.f32 %v2287, %v2327
    %v2329 = vpop.f32.mrf.mxu0
    %v2330 = vadd.f32 %v2289, %v2329
    %v2331 = vpop.f32.mrf.mxu0
    %v2332 = vpop.f32.mrf.mxu0
    %2333 = vdwg.mxu0
    %2334 = vmatprep.subr.bf16.mxu0 %v2011
    %2335 = vmatpush1.bf16.msra.mxu0 %v2010
    %2336 = vmatprep.subr.bf16.mxu0 %v2009
    %2337 = vmatpush1.bf16.msra.mxu0 %v2008
    %2338 = vmatprep.subr.bf16.mxu0 %v2007
    %2339 = vmatpush1.bf16.msra.mxu0 %v2006
    %2340 = vmatprep.subr.bf16.mxu0 %v2005
    %2341 = vmatpush1.bf16.msra.mxu0 %v2004
    %2342 = vmatprep.subr.bf16.mxu0 %v2003
    %2343 = vmatpush1.bf16.msra.mxu0 %v2002
    %2344 = vmatprep.subr.bf16.mxu0 %v2001
    %2345 = vmatpush1.bf16.msra.mxu0 %v2000
    %2346 = vmatprep.subr.bf16.mxu0 %v1999
    %2347 = vmatpush1.bf16.msra.mxu0 %v1998
    %2348 = vmatprep.subr.bf16.mxu0 %v1997
    %2349 = vmatpush1.bf16.msra.mxu0 %v1996
    %2350 = vmatprep.subr.bf16.mxu0 %v2027
    %2351 = vmatpush2.bf16.msra.mxu0 %v2026
    %2352 = vmatprep.subr.bf16.mxu0 %v2025
    %2353 = vmatpush2.bf16.msra.mxu0 %v2024
    %2354 = vmatprep.subr.bf16.mxu0 %v2023
    %2355 = vmatpush2.bf16.msra.mxu0 %v2022
    %2356 = vmatprep.subr.bf16.mxu0 %v2021
    %2357 = vmatpush2.bf16.msra.mxu0 %v2020
    %2358 = vmatprep.subr.bf16.mxu0 %v2019
    %2359 = vmatpush2.bf16.msra.mxu0 %v2018
    %2360 = vmatprep.subr.bf16.mxu0 %v2017
    %2361 = vmatpush2.bf16.msra.mxu0 %v2016
    %2362 = vmatprep.subr.bf16.mxu0 %v2015
    %2363 = vmatpush2.bf16.msra.mxu0 %v2014
    %2364 = vmatprep.subr.bf16.mxu0 %v2013
    %2365 = vmatpush2.bf16.msra.mxu0 %v2012
    %2366 = vmatprep.mubr.bf16.mxu0 %v1437
    %2367 = vmatmul.mubr.bf16.gmra.mxu0 %v1436
    %v2368 = vpop.f32.mrf.mxu0
    %v2369 = vadd.f32 %v2328, %v2368
    %v2370 = vpop.f32.mrf.mxu0
    %v2371 = vadd.f32 %v2330, %v2370
    %v2372 = vpop.f32.mrf.mxu0
    %v2373 = vpop.f32.mrf.mxu0
    %2374 = vdwg.mxu0
    %2375 = vmatprep.subr.bf16.mxu0 %v2043
    %2376 = vmatpush1.bf16.msra.mxu0 %v2042
    %2377 = vmatprep.subr.bf16.mxu0 %v2041
    %2378 = vmatpush1.bf16.msra.mxu0 %v2040
    %2379 = vmatprep.subr.bf16.mxu0 %v2039
    %2380 = vmatpush1.bf16.msra.mxu0 %v2038
    %2381 = vmatprep.subr.bf16.mxu0 %v2037
    %2382 = vmatpush1.bf16.msra.mxu0 %v2036
    %2383 = vmatprep.subr.bf16.mxu0 %v2035
    %2384 = vmatpush1.bf16.msra.mxu0 %v2034
    %2385 = vmatprep.subr.bf16.mxu0 %v2033
    %2386 = vmatpush1.bf16.msra.mxu0 %v2032
    %2387 = vmatprep.subr.bf16.mxu0 %v2031
    %2388 = vmatpush1.bf16.msra.mxu0 %v2030
    %2389 = vmatprep.subr.bf16.mxu0 %v2029
    %2390 = vmatpush1.bf16.msra.mxu0 %v2028
    %2391 = vmatprep.subr.bf16.mxu0 %v2059
    %2392 = vmatpush2.bf16.msra.mxu0 %v2058
    %2393 = vmatprep.subr.bf16.mxu0 %v2057
    %2394 = vmatpush2.bf16.msra.mxu0 %v2056
    %2395 = vmatprep.subr.bf16.mxu0 %v2055
    %2396 = vmatpush2.bf16.msra.mxu0 %v2054
    %2397 = vmatprep.subr.bf16.mxu0 %v2053
    %2398 = vmatpush2.bf16.msra.mxu0 %v2052
    %2399 = vmatprep.subr.bf16.mxu0 %v2051
    %2400 = vmatpush2.bf16.msra.mxu0 %v2050
    %2401 = vmatprep.subr.bf16.mxu0 %v2049
    %2402 = vmatpush2.bf16.msra.mxu0 %v2048
    %2403 = vmatprep.subr.bf16.mxu0 %v2047
    %2404 = vmatpush2.bf16.msra.mxu0 %v2046
    %2405 = vmatprep.subr.bf16.mxu0 %v2045
    %2406 = vmatpush2.bf16.msra.mxu0 %v2044
    %2407 = vmatprep.mubr.bf16.mxu0 %v1439
    %2408 = vmatmul.mubr.bf16.gmra.mxu0 %v1438
    %v2409 = vpop.f32.mrf.mxu0
    %v2410 = vadd.f32 %v2369, %v2409
    %v2411 = vpop.f32.mrf.mxu0
    %v2412 = vadd.f32 %v2371, %v2411
    %v2413 = vpop.f32.mrf.mxu0
    %v2414 = vpop.f32.mrf.mxu0
    %2415 = vdwg.mxu0
    %2416 = vmatprep.subr.bf16.mxu0 %v2075
    %2417 = vmatpush1.bf16.msra.mxu0 %v2074
    %2418 = vmatprep.subr.bf16.mxu0 %v2073
    %2419 = vmatpush1.bf16.msra.mxu0 %v2072
    %2420 = vmatprep.subr.bf16.mxu0 %v2071
    %2421 = vmatpush1.bf16.msra.mxu0 %v2070
    %2422 = vmatprep.subr.bf16.mxu0 %v2069
    %2423 = vmatpush1.bf16.msra.mxu0 %v2068
    %2424 = vmatprep.subr.bf16.mxu0 %v2067
    %2425 = vmatpush1.bf16.msra.mxu0 %v2066
    %2426 = vmatprep.subr.bf16.mxu0 %v2065
    %2427 = vmatpush1.bf16.msra.mxu0 %v2064
    %2428 = vmatprep.subr.bf16.mxu0 %v2063
    %2429 = vmatpush1.bf16.msra.mxu0 %v2062
    %2430 = vmatprep.subr.bf16.mxu0 %v2061
    %2431 = vmatpush1.bf16.msra.mxu0 %v2060
    %2432 = vmatprep.subr.bf16.mxu0 %v2091
    %2433 = vmatpush2.bf16.msra.mxu0 %v2090
    %2434 = vmatprep.subr.bf16.mxu0 %v2089
    %2435 = vmatpush2.bf16.msra.mxu0 %v2088
    %2436 = vmatprep.subr.bf16.mxu0 %v2087
    %2437 = vmatpush2.bf16.msra.mxu0 %v2086
    %2438 = vmatprep.subr.bf16.mxu0 %v2085
    %2439 = vmatpush2.bf16.msra.mxu0 %v2084
    %2440 = vmatprep.subr.bf16.mxu0 %v2083
    %2441 = vmatpush2.bf16.msra.mxu0 %v2082
    %2442 = vmatprep.subr.bf16.mxu0 %v2081
    %2443 = vmatpush2.bf16.msra.mxu0 %v2080
    %2444 = vmatprep.subr.bf16.mxu0 %v2079
    %2445 = vmatpush2.bf16.msra.mxu0 %v2078
    %2446 = vmatprep.subr.bf16.mxu0 %v2077
    %2447 = vmatpush2.bf16.msra.mxu0 %v2076
    %2448 = vmatprep.mubr.bf16.mxu0 %v1441
    %2449 = vmatmul.mubr.bf16.gmra.mxu0 %v1440
    %v2450 = vpop.f32.mrf.mxu0
    %v2451 = vadd.f32 %v2410, %v2450
    %v2452 = vpop.f32.mrf.mxu0
    %v2453 = vadd.f32 %v2412, %v2452
    %v2454 = vpop.f32.mrf.mxu0
    %v2455 = vpop.f32.mrf.mxu0
    %2456 = vdwg.mxu0
    %v2457 = vmax.f32 %v2451, 0.0
    %v2458 = vmax.f32 %v2453, 0.0
    %v2459 = vld [vmem:[#allocation7] sm:$0xff]
    %v2460 = vld [vmem:[#allocation7 + $0x8] sm:$0xff]
    %v2461 = vld [vmem:[#allocation7 + $0x10] sm:$0xff]
    %v2462 = vld [vmem:[#allocation7 + $0x18] sm:$0xff]
    %v2463 = vld [vmem:[#allocation7 + $0x20] sm:$0xff]
    %v2464 = vld [vmem:[#allocation7 + $0x28] sm:$0xff]
    %v2465 = vld [vmem:[#allocation7 + $0x30] sm:$0xff]
    %v2466 = vld [vmem:[#allocation7 + $0x38] sm:$0xff]
    %v2467 = vld [vmem:[#allocation7 + $0x40] sm:$0xff]
    %v2468 = vld [vmem:[#allocation7 + $0x48] sm:$0xff]
    %v2469 = vld [vmem:[#allocation7 + $0x50] sm:$0xff]
    %v2470 = vld [vmem:[#allocation7 + $0x58] sm:$0xff]
    %v2471 = vld [vmem:[#allocation7 + $0x60] sm:$0xff]
    %v2472 = vld [vmem:[#allocation7 + $0x68] sm:$0xff]
    %v2473 = vld [vmem:[#allocation7 + $0x70] sm:$0xff]
    %v2474 = vld [vmem:[#allocation7 + $0x78] sm:$0xff]
    %v2475 = vld [vmem:[#allocation7 + $0x80] sm:$0xff]
    %v2476 = vld [vmem:[#allocation7 + $0x88] sm:$0xff]
    %v2477 = vld [vmem:[#allocation7 + $0x90] sm:$0xff]
    %v2478 = vld [vmem:[#allocation7 + $0x98] sm:$0xff]
    %v2479 = vld [vmem:[#allocation7 + $0xa0] sm:$0xff]
    %v2480 = vld [vmem:[#allocation7 + $0xa8] sm:$0xff]
    %v2481 = vld [vmem:[#allocation7 + $0xb0] sm:$0xff]
    %v2482 = vld [vmem:[#allocation7 + $0xb8] sm:$0xff]
    %v2483 = vld [vmem:[#allocation7 + $0xc0] sm:$0xff]
    %v2484 = vld [vmem:[#allocation7 + $0xc8] sm:$0xff]
    %v2485 = vld [vmem:[#allocation7 + $0xd0] sm:$0xff]
    %v2486 = vld [vmem:[#allocation7 + $0xd8] sm:$0xff]
    %v2487 = vld [vmem:[#allocation7 + $0xe0] sm:$0xff]
    %v2488 = vld [vmem:[#allocation7 + $0xe8] sm:$0xff]
    %v2489 = vld [vmem:[#allocation7 + $0xf0] sm:$0xff]
    %v2490 = vld [vmem:[#allocation7 + $0xf8] sm:$0xff]
    %v2491 = vld [vmem:[%s4] sm:$0x1]
    %v2493 = vlaneseq
    %v2494 = vshrl.u32 %v2493, 7
    %v2495 = vsub.s32 0, %v2494
    %v2496 = vrot.slane %v2491, %v2495
    %2498 = vmatprep.subr.mxu0 0.0
    %2499 = vmatpush1.msra.mxu0 %v2474
    %2500 = vmatprep.subr.mxu0 0.0
    %2501 = vmatpush1.msra.mxu0 %v2473
    %2502 = vmatprep.subr.mxu0 0.0
    %2503 = vmatpush1.msra.mxu0 %v2472
    %2504 = vmatprep.subr.mxu0 0.0
    %2505 = vmatpush1.msra.mxu0 %v2471
    %2506 = vmatprep.subr.mxu0 0.0
    %2507 = vmatpush1.msra.mxu0 %v2470
    %2508 = vmatprep.subr.mxu0 0.0
    %2509 = vmatpush1.msra.mxu0 %v2469
    %2510 = vmatprep.subr.mxu0 0.0
    %2511 = vmatpush1.msra.mxu0 %v2468
    %2512 = vmatprep.subr.mxu0 0.0
    %2513 = vmatpush1.msra.mxu0 %v2467
    %2514 = vmatprep.subr.mxu0 0.0
    %2515 = vmatpush1.msra.mxu0 %v2466
    %2516 = vmatprep.subr.mxu0 0.0
    %2517 = vmatpush1.msra.mxu0 %v2465
    %2518 = vmatprep.subr.mxu0 0.0
    %2519 = vmatpush1.msra.mxu0 %v2464
    %2520 = vmatprep.subr.mxu0 0.0
    %2521 = vmatpush1.msra.mxu0 %v2463
    %2522 = vmatprep.subr.mxu0 0.0
    %2523 = vmatpush1.msra.mxu0 %v2462
    %2524 = vmatprep.subr.mxu0 0.0
    %2525 = vmatpush1.msra.mxu0 %v2461
    %2526 = vmatprep.subr.mxu0 0.0
    %2527 = vmatpush1.msra.mxu0 %v2460
    %2528 = vmatprep.subr.mxu0 0.0
    %2529 = vmatpush1.msra.mxu0 %v2459
    %2530 = vmatprep.subr.mxu0 0.0
    %2531 = vmatpush2.msra.mxu0 %v2490
    %2532 = vmatprep.subr.mxu0 0.0
    %2533 = vmatpush2.msra.mxu0 %v2489
    %2534 = vmatprep.subr.mxu0 0.0
    %2535 = vmatpush2.msra.mxu0 %v2488
    %2536 = vmatprep.subr.mxu0 0.0
    %2537 = vmatpush2.msra.mxu0 %v2487
    %2538 = vmatprep.subr.mxu0 0.0
    %2539 = vmatpush2.msra.mxu0 %v2486
    %2540 = vmatprep.subr.mxu0 0.0
    %2541 = vmatpush2.msra.mxu0 %v2485
    %2542 = vmatprep.subr.mxu0 0.0
    %2543 = vmatpush2.msra.mxu0 %v2484
    %2544 = vmatprep.subr.mxu0 0.0
    %2545 = vmatpush2.msra.mxu0 %v2483
    %2546 = vmatprep.subr.mxu0 0.0
    %2547 = vmatpush2.msra.mxu0 %v2482
    %2548 = vmatprep.subr.mxu0 0.0
    %2549 = vmatpush2.msra.mxu0 %v2481
    %2550 = vmatprep.subr.mxu0 0.0
    %2551 = vmatpush2.msra.mxu0 %v2480
    %2552 = vmatprep.subr.mxu0 0.0
    %2553 = vmatpush2.msra.mxu0 %v2479
    %2554 = vmatprep.subr.mxu0 0.0
    %2555 = vmatpush2.msra.mxu0 %v2478
    %2556 = vmatprep.subr.mxu0 0.0
    %2557 = vmatpush2.msra.mxu0 %v2477
    %2558 = vmatprep.subr.mxu0 0.0
    %2559 = vmatpush2.msra.mxu0 %v2476
    %2560 = vmatprep.subr.mxu0 0.0
    %2561 = vmatpush2.msra.mxu0 %v2475
    %2562 = vmatprep.mubr.f32.mxu0 %v2458
    %2563 = vmatmul.mubr.f32.gmra.mxu0 %v2457
    %v2564 = vpop.f32.mrf.mxu0
    %v2565 = vadd.f32 %v2496, %v2564
    %v2566 = vpop.f32.mrf.mxu0
    %2567 = vdwg.mxu0
    %2568 = vst [vmem:[#allocation8] sm:$0xff] %v2565
    // Predicated region
    $region34: #{tpu_custom_call.1} parent=1 // pred_check
      _
    $region35: #{tpu_custom_call.1} parent=1 // pred_check_branch
      %2570 = sbr.rel (0) target = $region37
    $region36: #{tpu_custom_call.1} parent=1 // pred_region
      %s2572 = ssub.s32 128, 128
      %2573 = vsyncadd [#allocation4], %s2572
      %s2575 = sshll.u32 [#allocation8], 4
      %s2576 = int_to_ptr.vmem [resolvable:$true] %s2575
      %2578 = dma.vmem_to_hbm [thread:$0]  %s2576, 128, %s5, [#allocation4]
    $region37: #{tpu_custom_call.1} parent=1 // pred_fallthru
      _
    // Predicated region
    $region38: #{tpu_custom_call.1} parent=1 // pred_check
      _
    $region39: #{tpu_custom_call.1} parent=1 // pred_check_branch
      %2580 = sbr.rel (0) target = $region41
    $region40: #{tpu_custom_call.1} parent=1 // pred_region
      %2581 = dma.done [#allocation4], 128
    $region41: #{tpu_custom_call.1} parent=1 // pred_fallthru
      _
    %2582 = vsyncpa [#allocation3], 1
    %2583 = vsyncpa [#allocation6], 1
    %2584 = vsyncpa [#allocation4], 1

</llo_original>
